<compile_context>
chip_gen: v6e
topology: v6e:2x2x1
jax: 0.10.0
libtpu: 0.0.40
codegen_flags: <defaults>
</compile_context>

<pallas_src>
import functools

import jax
import jax.numpy as jnp
import numpy as np
from jax import lax
from jax.experimental import pallas as pl
from jax.experimental.pallas import tpu as pltpu

EPS = 1e-5


def _silu(x):
    # x * sigmoid(x).  Exact divide; pl.reciprocal(approx=True) would move the
    # divide to the EUP slot but loosens the reference tolerance.
    return x / (1.0 + jnp.exp(-x))


# ---------------------------------------------------------------------------
# Kernel 1: cv1 raw 1x1 conv + BN1 partial (sum, sumsq).  Grid (N, spatial).
#   x block (1, C1, ts) -> y block (1, c_, ts);  spatial tile on the lane axis.
#   p1 block (1, c_, 2) stays resident across the spatial axis (accumulator).
# ---------------------------------------------------------------------------
def _cv1_kernel(x_ref, w_ref, y_ref, p1_ref):
    si = pl.program_id(1)
    x = x_ref[0].astype(jnp.float32)              # (C1, ts)
    w = w_ref[...].astype(jnp.float32)            # (c_, C1)
    c1 = x.shape[0]
    if c1 >= 32:
        # MXU path for real channel counts (vext slot, VPU stays free).
        y = jnp.dot(w, x, preferred_element_type=jnp.float32)
    else:
        # Tiny channel count: C1 broadcast MACs on the VPU beat a masked MXU tile.
        y = w[:, 0:1] * x[0:1]
        for ci in range(1, c1):
            y = y + w[:, ci:ci + 1] * x[ci:ci + 1]
    y_ref[0] = y.astype(y_ref.dtype)

    @pl.when(si == 0)
    def _():
        p1_ref[...] = jnp.zeros_like(p1_ref)

    p1_ref[0, :, 0:1] += y.sum(axis=1, keepdims=True)
    p1_ref[0, :, 1:2] += (y * y).sum(axis=1, keepdims=True)


# ---------------------------------------------------------------------------
# Kernel 2: fused BN1+SiLU + 5x5 depthwise conv (raw) + BN2 partials.
#   Grid (N, channel blocks).  Flattened (tc, S) layout; 2-pixel halo in a
#   flat zero-padded VMEM scratch; horizontal OOB taps masked per column group.
#   Also writes the activated y branch directly into out[:, 0] (the concat).
# ---------------------------------------------------------------------------
def _cv2_dw_kernel(H, W, y_ref, w_ref, s1_ref, b1_ref,
                   ya_ref, z_ref, p2_ref, ap_ref):
    cb = pl.program_id(1)
    tc, S = y_ref.shape[1], y_ref.shape[2]
    c_full = p2_ref.shape[1]
    n_cb = c_full // tc
    padl = ((2 * W + 2 + 127) // 128) * 128       # lane-aligned left pad
    padr = 2 * W + 2
    L = ap_ref.shape[1]

    # ---- folded BN1 + SiLU: this *is* the y branch of the final concat -------
    y = y_ref[0].astype(jnp.float32)              # (tc, S)
    a = _silu(y * s1_ref[...] + b1_ref[...])
    ya_ref[0, 0] = a.astype(ya_ref.dtype)

    # ---- flat zero halo (2 rows + 2 cols each side) in VMEM scratch ----------
    ap_ref[:, 0:padl] = jnp.zeros((tc, padl), jnp.float32)
    ap_ref[:, padl + S:L] = jnp.zeros((tc, padr), jnp.float32)
    ap_ref[:, padl:padl + S] = a

    # ---- 25-tap depthwise conv, grouped by horizontal offset -----------------
    # TODO(synk): on v6e/v7x the tap MACs could run in bf16 (2x VALU packing).
    wk = w_ref[...].astype(jnp.float32)           # (tc, 25), k = kh*5 + kw
    wpos = lax.broadcasted_iota(jnp.int32, (1, S), 1) % W
    acc = None
    for j in range(5):                            # kw
        dw = j - 2
        col = None
        for i in range(5):                        # kh
            dh = i - 2
            off = padl + dh * W + dw
            k = i * 5 + j
            term = ap_ref[:, off:off + S] * wk[:, k:k + 1]
            col = term if col is None else col + term
        if dw > 0:
            col = jnp.where(wpos < W - dw, col, 0.0)
        elif dw < 0:
            col = jnp.where(wpos >= -dw, col, 0.0)
        acc = col if acc is None else acc + col
    z_ref[0] = acc.astype(z_ref.dtype)

    # ---- BN2 partial statistics (resident across the channel-block axis) -----
    @pl.when(cb == 0)
    def _():
        p2_ref[...] = jnp.zeros_like(p2_ref)

    zs = acc.sum(axis=1, keepdims=True)           # (tc, 1)
    zq = (acc * acc).sum(axis=1, keepdims=True)
    if n_cb == 1:
        p2_ref[0, :, 0:1] = zs
        p2_ref[0, :, 1:2] = zq
    else:
        off_c = pl.multiple_of(cb * tc, tc)
        p2_ref[0, pl.ds(off_c, tc), 0:1] = zs
        p2_ref[0, pl.ds(off_c, tc), 1:2] = zq


# ---------------------------------------------------------------------------
# Kernel 3: BN2+SiLU on the z branch, written straight into the z half of the
#   concatenated output.  The y half was already written by K2 and is carried
#   through untouched via input_output_aliases.  Grid (N, spatial tiles).
# ---------------------------------------------------------------------------
def _cv2_bn_silu_kernel(z_ref, s2_ref, b2_ref, dst_ref, o_ref):
    del dst_ref                                   # aliased concat buffer (y half)
    z = z_ref[0].astype(jnp.float32)              # (c_, ts)
    o_ref[0, 0] = _silu(z * s2_ref[...] + b2_ref[...]).astype(o_ref.dtype)


# ---------------------------------------------------------------------------
# Wrapper (NCHW in / NCHW out, like the PyTorch module)
# ---------------------------------------------------------------------------
def _spatial_tile(S, c_eff):
    """Lane-dense spatial tile that divides S; ~<=2 MiB per (c_eff, ts) f32 slab."""
    if S % 128 != 0:
        return S                                   # full extent (= array dim)
    budget = (2 * 1024 * 1024) // 4
    ts = S
    while ts % 256 == 0 and ts > 512 and c_eff * ts > budget:
        ts //= 2
    return ts


def _channel_block(c, S):
    """Channel block for the depthwise kernel: a multiple of 8 dividing c (or c)."""
    if c <= 8 or c % 8 != 0:
        return c   # TODO(synk): odd c_>8 falls back to full c_ (VMEM heavy for huge S)
    budget = (2 * 1024 * 1024) // 4
    tc = c
    while tc > 8 and tc % 2 == 0 and (tc // 2) % 8 == 0 and tc * S > budget:
        tc //= 2
    return tc


def ghost_conv(x, params, *, act_dtype=jnp.float32):
    """GhostConv forward. x: (N, c1, H, W) float. Returns (N, 2*c_, H, W)."""
    N, C1, H, W = x.shape
    w1 = params["w1"]                              # (c_, C1)
    w2 = params["w2"]                              # (c_, 25)
    c_ = w1.shape[0]
    S = H * W
    out_dtype = x.dtype

    ts = _spatial_tile(S, max(C1, c_))
    n_s = S // ts
    tc = _channel_block(c_, S)
    n_cb = c_ // tc

    vmem_full = pl.BlockSpec(memory_space=pltpu.MemorySpace.VMEM)
    vlimit = 48 * 1024 * 1024

    x_flat = x.reshape(N, C1, S)

    # ---- K1: cv1 raw 1x1 conv + BN1 partial sums ------------------------------
    y_raw, p1 = pl.pallas_call(
        _cv1_kernel,
        grid=(N, n_s),
        in_specs=[pl.BlockSpec((1, C1, ts), lambda n, s: (n, 0, s)), vmem_full],
        out_specs=[pl.BlockSpec((1, c_, ts), lambda n, s: (n, 0, s)),
                   pl.BlockSpec((1, c_, 2), lambda n, s: (n, 0, 0))],
        out_shape=[jax.ShapeDtypeStruct((N, c_, S), act_dtype),
                   jax.ShapeDtypeStruct((N, c_, 2), jnp.float32)],
        compiler_params=pltpu.CompilerParams(
            dimension_semantics=("parallel", "arbitrary"),
            vmem_limit_bytes=vlimit),
    )(x_flat, w1)

    # fold BN1 batch stats (training-mode, biased variance) with the affine
    cnt = float(N * S)
    t1 = jnp.sum(p1, axis=0)                       # (c_, 2)
    mu1 = t1[:, 0] / cnt
    var1 = jnp.maximum(t1[:, 1] / cnt - mu1 * mu1, 0.0)
    s1 = params["bn1_g"] * lax.rsqrt(var1 + EPS)
    b1 = params["bn1_b"] - mu1 * s1

    # ---- K2: fused BN1+SiLU + 5x5 depthwise; writes y branch of out + z_raw ---
    padl = ((2 * W + 2 + 127) // 128) * 128
    L = padl + S + 2 * W + 2
    out_y, z_raw, p2 = pl.pallas_call(
        functools.partial(_cv2_dw_kernel, H, W),
        grid=(N, n_cb),
        in_specs=[
            pl.BlockSpec((1, tc, S), lambda n, c: (n, c, 0)),
            pl.BlockSpec((tc, 25), lambda n, c: (c, 0)),
            pl.BlockSpec((tc, 1), lambda n, c: (c, 0)),
            pl.BlockSpec((tc, 1), lambda n, c: (c, 0)),
        ],
        out_specs=[
            pl.BlockSpec((1, 1, tc, S), lambda n, c: (n, 0, c, 0)),
            pl.BlockSpec((1, tc, S), lambda n, c: (n, c, 0)),
            pl.BlockSpec((1, c_, 2), lambda n, c: (n, 0, 0)),
        ],
        out_shape=[jax.ShapeDtypeStruct((N, 2, c_, S), out_dtype),
                   jax.ShapeDtypeStruct((N, c_, S), act_dtype),
                   jax.ShapeDtypeStruct((N, c_, 2), jnp.float32)],
        scratch_shapes=[pltpu.VMEM((tc, L), jnp.float32)],
        compiler_params=pltpu.CompilerParams(
            dimension_semantics=("parallel", "arbitrary"),
            vmem_limit_bytes=vlimit),
    )(y_raw, w2,
      s1.reshape(c_, 1).astype(jnp.float32),
      b1.reshape(c_, 1).astype(jnp.float32))

    t2 = jnp.sum(p2, axis=0)
    mu2 = t2[:, 0] / cnt
    var2 = jnp.maximum(t2[:, 1] / cnt - mu2 * mu2, 0.0)
    s2 = params["bn2_g"] * lax.rsqrt(var2 + EPS)
    b2 = params["bn2_b"] - mu2 * s2

    # ---- K3: BN2+SiLU on z, written into the z half of the aliased output -----
    out = pl.pallas_call(
        _cv2_bn_silu_kernel,
        grid=(N, n_s),
        in_specs=[
            pl.BlockSpec((1, c_, ts), lambda n, s: (n, 0, s)),
            vmem_full, vmem_full,
            pl.BlockSpec(memory_space=pl.ANY),     # aliased concat buffer (y half)
        ],
        out_specs=pl.BlockSpec((1, 1, c_, ts), lambda n, s: (n, 1, 0, s)),
        out_shape=jax.ShapeDtypeStruct((N, 2, c_, S), out_dtype),
        input_output_aliases={3: 0},
        compiler_params=pltpu.CompilerParams(
            dimension_semantics=("parallel", "parallel"),
            vmem_limit_bytes=vlimit),
    )(z_raw,
      s2.reshape(c_, 1).astype(jnp.float32),
      b2.reshape(c_, 1).astype(jnp.float32),
      out_y)

    return out.reshape(N, 2 * c_, H, W)


# ---------------------------------------------------------------------------
# Deterministic parameter init (shapes follow the PyTorch module __init__)
# ---------------------------------------------------------------------------
def init_params(key, c1, c2):
    c_ = c2 // 2
    ks = jax.random.split(key, 6)
    # cv1.conv.weight: PyTorch (c_, c1, 1, 1) -> stored as (c_, c1)
    w1 = 0.2 * jax.random.normal(ks[0], (c_, c1), jnp.float32)
    # cv2.conv.weight: PyTorch depthwise (c_, 1, 5, 5) -> stored as (c_, 25)
    w2 = 0.2 * jax.random.normal(ks[1], (c_, 25), jnp.float32)
    bn1_g = 1.0 + 0.1 * jax.random.normal(ks[2], (c_,), jnp.float32)
    bn1_b = 0.1 * jax.random.normal(ks[3], (c_,), jnp.float32)
    bn2_g = 1.0 + 0.1 * jax.random.normal(ks[4], (c_,), jnp.float32)
    bn2_b = 0.1 * jax.random.normal(ks[5], (c_,), jnp.float32)
    return dict(w1=w1, w2=w2, bn1_g=bn1_g, bn1_b=bn1_b, bn2_g=bn2_g, bn2_b=bn2_b)


# ---------------------------------------------------------------------------
# Pure-JAX reference (independent conv path via lax.conv) for a sanity check
# ---------------------------------------------------------------------------
def _bn_train(x, g, b):
    mu = jnp.mean(x, axis=(0, 2, 3), keepdims=True)
    var = jnp.var(x, axis=(0, 2, 3), keepdims=True)
    xn = (x - mu) * lax.rsqrt(var + EPS)
    return xn * g[None, :, None, None] + b[None, :, None, None]


def reference(x, params):
    c_ = params["w1"].shape[0]
    w1 = params["w1"][:, :, None, None]                        # (c_, c1, 1, 1)
    y = lax.conv_general_dilated(x, w1, (1, 1), "VALID",
                                 dimension_numbers=("NCHW", "OIHW", "NCHW"))
    y = jax.nn.silu(_bn_train(y, params["bn1_g"], params["bn1_b"]))
    w2 = params["w2"].reshape(c_, 5, 5)[:, None, :, :]         # (c_, 1, 5, 5)
    z = lax.conv_general_dilated(y, w2, (1, 1), ((2, 2), (2, 2)),
                                 feature_group_count=c_,
                                 dimension_numbers=("NCHW", "OIHW", "NCHW"))
    z = jax.nn.silu(_bn_train(z, params["bn2_g"], params["bn2_b"]))
    return jnp.concatenate([y, z], axis=1)


if __name__ == "__main__":
    key = jax.random.PRNGKey(0)
    kx, kp = jax.random.split(key)

    c1, c2 = 4, 8                                  # GhostConv(c1=4, c2=8, k=1, s=1)
    x = jax.random.normal(kx, (2, c1, 16, 16), jnp.float32)    # NCHW like PyTorch
    params = init_params(kp, c1, c2)

    out = jax.block_until_ready(jax.jit(ghost_conv)(x, params))
    assert out.shape == (2, c2, 16, 16), out.shape

    ref = jax.block_until_ready(reference(x, params))
    np.testing.assert_allclose(np.asarray(out), np.asarray(ref),
                               atol=2e-4, rtol=2e-4)
    print("KERNEL_OK")
</pallas_src>

<mosaic_0001>
module attributes {stable_mosaic.version = 11 : i64} {
  func.func @_cv1_kernel(%arg0: i32, %arg1: i32, %arg2: memref<1x4x256xf32, #tpu.memory_space<vmem>>, %arg3: memref<4x4xf32, #tpu.memory_space<vmem>>, %arg4: memref<1x4x256xf32, #tpu.memory_space<vmem>>, %arg5: memref<1x4x2xf32, #tpu.memory_space<vmem>>) attributes {dimension_semantics = [#tpu.dimension_semantics<parallel>, #tpu.dimension_semantics<arbitrary>], iteration_bounds = array<i64: 2, 1>, scalar_prefetch = 0 : i64, scratch_operands = 0 : i64, tpu.core_type = #tpu.core_type<tc>, window_params = [{transform_indices = @transform_0, window_bounds = array<i64: 1, 4, 256>}, {pipeline_mode = #tpu.pipeline_mode<synchronous>, transform_indices = @transform_1, window_bounds = array<i64: 4, 4>}, {transform_indices = @transform_2, window_bounds = array<i64: 1, 4, 256>}, {transform_indices = @transform_3, window_bounds = array<i64: 1, 4, 2>}]} {
    %c0 = arith.constant 0 : index
    %c0_0 = arith.constant 0 : index
    %c0_1 = arith.constant 0 : index
    %0 = vector.load %arg2[%c0, %c0_0, %c0_1] : memref<1x4x256xf32, #tpu.memory_space<vmem>>, vector<1x4x256xf32>
    %1 = vector.shape_cast %0 : vector<1x4x256xf32> to vector<4x256xf32>
    %c0_2 = arith.constant 0 : index
    %c0_3 = arith.constant 0 : index
    %2 = vector.load %arg3[%c0_2, %c0_3] : memref<4x4xf32, #tpu.memory_space<vmem>>, vector<4x4xf32>
    %3 = vector.extract_strided_slice %2 {offsets = [0, 0], sizes = [4, 1], strides = [1, 1]} : vector<4x4xf32> to vector<4x1xf32>
    %4 = vector.extract_strided_slice %1 {offsets = [0, 0], sizes = [1, 256], strides = [1, 1]} : vector<4x256xf32> to vector<1x256xf32>
    %5 = vector.broadcast %3 : vector<4x1xf32> to vector<4x256xf32>
    %6 = vector.broadcast %4 : vector<1x256xf32> to vector<4x256xf32>
    %7 = arith.mulf %5, %6 : vector<4x256xf32>
    %8 = vector.extract_strided_slice %2 {offsets = [0, 1], sizes = [4, 1], strides = [1, 1]} : vector<4x4xf32> to vector<4x1xf32>
    %9 = vector.extract_strided_slice %1 {offsets = [1, 0], sizes = [1, 256], strides = [1, 1]} : vector<4x256xf32> to vector<1x256xf32>
    %10 = vector.broadcast %8 : vector<4x1xf32> to vector<4x256xf32>
    %11 = vector.broadcast %9 : vector<1x256xf32> to vector<4x256xf32>
    %12 = arith.mulf %10, %11 : vector<4x256xf32>
    %13 = arith.addf %7, %12 : vector<4x256xf32>
    %14 = vector.extract_strided_slice %2 {offsets = [0, 2], sizes = [4, 1], strides = [1, 1]} : vector<4x4xf32> to vector<4x1xf32>
    %15 = vector.extract_strided_slice %1 {offsets = [2, 0], sizes = [1, 256], strides = [1, 1]} : vector<4x256xf32> to vector<1x256xf32>
    %16 = vector.broadcast %14 : vector<4x1xf32> to vector<4x256xf32>
    %17 = vector.broadcast %15 : vector<1x256xf32> to vector<4x256xf32>
    %18 = arith.mulf %16, %17 : vector<4x256xf32>
    %19 = arith.addf %13, %18 : vector<4x256xf32>
    %20 = vector.extract_strided_slice %2 {offsets = [0, 3], sizes = [4, 1], strides = [1, 1]} : vector<4x4xf32> to vector<4x1xf32>
    %21 = vector.extract_strided_slice %1 {offsets = [3, 0], sizes = [1, 256], strides = [1, 1]} : vector<4x256xf32> to vector<1x256xf32>
    %22 = vector.broadcast %20 : vector<4x1xf32> to vector<4x256xf32>
    %23 = vector.broadcast %21 : vector<1x256xf32> to vector<4x256xf32>
    %24 = arith.mulf %22, %23 : vector<4x256xf32>
    %25 = arith.addf %19, %24 : vector<4x256xf32>
    %c0_4 = arith.constant 0 : index
    %c0_5 = arith.constant 0 : index
    %c0_6 = arith.constant 0 : index
    %26 = vector.load %arg4[%c0_4, %c0_5, %c0_6] : memref<1x4x256xf32, #tpu.memory_space<vmem>>, vector<1x4x256xf32>
    %27 = vector.shape_cast %26 : vector<1x4x256xf32> to vector<4x256xf32>
    %28 = vector.shape_cast %25 : vector<4x256xf32> to vector<1x4x256xf32>
    tpu.vector_store %arg4[%c0_4, %c0_5, %c0_6], %28 {strides = array<i32>} : memref<1x4x256xf32, #tpu.memory_space<vmem>>, vector<1x4x256xf32>,
    %c0_i32 = arith.constant 0 : i32
    %29 = arith.cmpi eq, %arg1, %c0_i32 : i32
    %30 = arith.extui %29 : i1 to i32
    %c0_i32_7 = arith.constant 0 : i32
    %31 = arith.cmpi ne, %30, %c0_i32_7 : i32
    scf.if %31 {
      %cst_20 = arith.constant 0.000000e+00 : f32
      %49 = vector.broadcast %cst_20 : f32 to vector<1x4x2xf32>
      %c0_21 = arith.constant 0 : index
      %c0_22 = arith.constant 0 : index
      %c0_23 = arith.constant 0 : index
      %50 = vector.load %arg5[%c0_21, %c0_22, %c0_23] : memref<1x4x2xf32, #tpu.memory_space<vmem>>, vector<1x4x2xf32>
      tpu.vector_store %arg5[%c0_21, %c0_22, %c0_23], %49 {strides = array<i32>} : memref<1x4x2xf32, #tpu.memory_space<vmem>>, vector<1x4x2xf32>,
    } else {
    }
    %c0_8 = arith.constant 0 : index
    %c0_9 = arith.constant 0 : index
    %c0_10 = arith.constant 0 : index
    %32 = vector.load %arg5[%c0_8, %c0_9, %c0_10] : memref<1x4x2xf32, #tpu.memory_space<vmem>>, vector<1x4x1xf32>
    %33 = vector.shape_cast %32 : vector<1x4x1xf32> to vector<4x1xf32>
    %cst = arith.constant dense<0.000000e+00> : vector<4xf32>
    %34 = vector.multi_reduction <add>, %25, %cst [1] : vector<4x256xf32> to vector<4xf32>
    %35 = vector.shape_cast %34 : vector<4xf32> to vector<4x1xf32>
    %36 = arith.addf %33, %35 : vector<4x1xf32>
    %c0_11 = arith.constant 0 : index
    %c0_12 = arith.constant 0 : index
    %c0_13 = arith.constant 0 : index
    %37 = vector.load %arg5[%c0_11, %c0_12, %c0_13] : memref<1x4x2xf32, #tpu.memory_space<vmem>>, vector<1x4x1xf32>
    %38 = vector.shape_cast %37 : vector<1x4x1xf32> to vector<4x1xf32>
    %39 = vector.shape_cast %36 : vector<4x1xf32> to vector<1x4x1xf32>
    tpu.vector_store %arg5[%c0_11, %c0_12, %c0_13], %39 {strides = array<i32>} : memref<1x4x2xf32, #tpu.memory_space<vmem>>, vector<1x4x1xf32>,
    %c0_14 = arith.constant 0 : index
    %c0_15 = arith.constant 0 : index
    %c1 = arith.constant 1 : index
    %40 = vector.load %arg5[%c0_14, %c0_15, %c1] : memref<1x4x2xf32, #tpu.memory_space<vmem>>, vector<1x4x1xf32>
    %41 = vector.shape_cast %40 : vector<1x4x1xf32> to vector<4x1xf32>
    %42 = arith.mulf %25, %25 : vector<4x256xf32>
    %cst_16 = arith.constant dense<0.000000e+00> : vector<4xf32>
    %43 = vector.multi_reduction <add>, %42, %cst_16 [1] : vector<4x256xf32> to vector<4xf32>
    %44 = vector.shape_cast %43 : vector<4xf32> to vector<4x1xf32>
    %45 = arith.addf %41, %44 : vector<4x1xf32>
    %c0_17 = arith.constant 0 : index
    %c0_18 = arith.constant 0 : index
    %c1_19 = arith.constant 1 : index
    %46 = vector.load %arg5[%c0_17, %c0_18, %c1_19] : memref<1x4x2xf32, #tpu.memory_space<vmem>>, vector<1x4x1xf32>
    %47 = vector.shape_cast %46 : vector<1x4x1xf32> to vector<4x1xf32>
    %48 = vector.shape_cast %45 : vector<4x1xf32> to vector<1x4x1xf32>
    tpu.vector_store %arg5[%c0_17, %c0_18, %c1_19], %48 {strides = array<i32>} : memref<1x4x2xf32, #tpu.memory_space<vmem>>, vector<1x4x1xf32>,
    return
  }
  func.func @transform_0(%arg0: i32, %arg1: i32) -> (i32, i32, i32) {
    %c0_i32 = arith.constant 0 : i32
    %c0_i32_0 = arith.constant 0 : i32
    return %arg0, %c0_i32, %arg1 : i32, i32, i32
  }
  func.func @transform_1(%arg0: i32, %arg1: i32) -> (i32, i32) {
    %c0_i32 = arith.constant 0 : i32
    %c0_i32_0 = arith.constant 0 : i32
    %c0_i32_1 = arith.constant 0 : i32
    return %c0_i32, %c0_i32_0 : i32, i32
  }
  func.func @transform_2(%arg0: i32, %arg1: i32) -> (i32, i32, i32) {
    %c0_i32 = arith.constant 0 : i32
    %c0_i32_0 = arith.constant 0 : i32
    return %arg0, %c0_i32, %arg1 : i32, i32, i32
  }
  func.func @transform_3(%arg0: i32, %arg1: i32) -> (i32, i32, i32) {
    %c0_i32 = arith.constant 0 : i32
    %c0_i32_0 = arith.constant 0 : i32
    %c0_i32_1 = arith.constant 0 : i32
    return %arg0, %c0_i32, %c0_i32_0 : i32, i32, i32
  }
}

module attributes {stable_mosaic.version = 11 : i64} {
  func.func @_cv2_bn_silu_kernel(%arg0: i32, %arg1: i32, %arg2: memref<1x4x256xf32, #tpu.memory_space<vmem>>, %arg3: memref<4x1xf32, #tpu.memory_space<vmem>>, %arg4: memref<4x1xf32, #tpu.memory_space<vmem>>, %arg5: memref<2x2x4x256xf32, #tpu.memory_space<any>>, %arg6: memref<1x1x4x256xf32, #tpu.memory_space<vmem>>) attributes {dimension_semantics = [#tpu.dimension_semantics<parallel>, #tpu.dimension_semantics<parallel>], iteration_bounds = array<i64: 2, 1>, scalar_prefetch = 0 : i64, scratch_operands = 0 : i64, tpu.core_type = #tpu.core_type<tc>, window_params = [{transform_indices = @transform_0, window_bounds = array<i64: 1, 4, 256>}, {pipeline_mode = #tpu.pipeline_mode<synchronous>, transform_indices = @transform_1, window_bounds = array<i64: 4, 1>}, {pipeline_mode = #tpu.pipeline_mode<synchronous>, transform_indices = @transform_2, window_bounds = array<i64: 4, 1>}, {}, {transform_indices = @transform_4, window_bounds = array<i64: 1, 1, 4, 256>}]} {
    %c0 = arith.constant 0 : index
    %c0_0 = arith.constant 0 : index
    %c0_1 = arith.constant 0 : index
    %0 = vector.load %arg2[%c0, %c0_0, %c0_1] : memref<1x4x256xf32, #tpu.memory_space<vmem>>, vector<1x4x256xf32>
    %1 = vector.shape_cast %0 : vector<1x4x256xf32> to vector<4x256xf32>
    %c0_2 = arith.constant 0 : index
    %c0_3 = arith.constant 0 : index
    %2 = vector.load %arg3[%c0_2, %c0_3] : memref<4x1xf32, #tpu.memory_space<vmem>>, vector<4x1xf32>
    %3 = vector.broadcast %2 : vector<4x1xf32> to vector<4x256xf32>
    %4 = arith.mulf %1, %3 : vector<4x256xf32>
    %c0_4 = arith.constant 0 : index
    %c0_5 = arith.constant 0 : index
    %5 = vector.load %arg4[%c0_4, %c0_5] : memref<4x1xf32, #tpu.memory_space<vmem>>, vector<4x1xf32>
    %6 = vector.broadcast %5 : vector<4x1xf32> to vector<4x256xf32>
    %7 = arith.addf %4, %6 : vector<4x256xf32>
    %cst = arith.constant 0.000000e+00 : f32
    %8 = vector.broadcast %cst : f32 to vector<4x256xf32>
    %9 = arith.subf %8, %7 : vector<4x256xf32>
    %10 = math.exp %9 : vector<4x256xf32>
    %cst_6 = arith.constant 1.000000e+00 : f32
    %11 = vector.broadcast %cst_6 : f32 to vector<4x256xf32>
    %12 = arith.addf %11, %10 : vector<4x256xf32>
    %13 = arith.divf %7, %12 : vector<4x256xf32>
    %c0_7 = arith.constant 0 : index
    %c0_8 = arith.constant 0 : index
    %c0_9 = arith.constant 0 : index
    %c0_10 = arith.constant 0 : index
    %14 = vector.load %arg6[%c0_7, %c0_8, %c0_9, %c0_10] : memref<1x1x4x256xf32, #tpu.memory_space<vmem>>, vector<1x1x4x256xf32>
    %15 = vector.shape_cast %14 : vector<1x1x4x256xf32> to vector<4x256xf32>
    %16 = vector.shape_cast %13 : vector<4x256xf32> to vector<1x1x4x256xf32>
    tpu.vector_store %arg6[%c0_7, %c0_8, %c0_9, %c0_10], %16 {strides = array<i32>} : memref<1x1x4x256xf32, #tpu.memory_space<vmem>>, vector<1x1x4x256xf32>,
    return
  }
  func.func @transform_0(%arg0: i32, %arg1: i32) -> (i32, i32, i32) {
    %c0_i32 = arith.constant 0 : i32
    %c0_i32_0 = arith.constant 0 : i32
    return %arg0, %c0_i32, %arg1 : i32, i32, i32
  }
  func.func @transform_1(%arg0: i32, %arg1: i32) -> (i32, i32) {
    %c0_i32 = arith.constant 0 : i32
    %c0_i32_0 = arith.constant 0 : i32
    %c0_i32_1 = arith.constant 0 : i32
    return %c0_i32, %c0_i32_0 : i32, i32
  }
  func.func @transform_2(%arg0: i32, %arg1: i32) -> (i32, i32) {
    %c0_i32 = arith.constant 0 : i32
    %c0_i32_0 = arith.constant 0 : i32
    %c0_i32_1 = arith.constant 0 : i32
    return %c0_i32, %c0_i32_0 : i32, i32
  }
  func.func @transform_4(%arg0: i32, %arg1: i32) -> (i32, i32, i32, i32) {
    %c1_i32 = arith.constant 1 : i32
    %c0_i32 = arith.constant 0 : i32
    %c0_i32_0 = arith.constant 0 : i32
    return %arg0, %c1_i32, %c0_i32, %arg1 : i32, i32, i32, i32
  }
}

module attributes {stable_mosaic.version = 11 : i64} {
  func.func @_cv2_dw_kernel(%arg0: i32, %arg1: i32, %arg2: memref<1x4x256xf32, #tpu.memory_space<vmem>>, %arg3: memref<4x25xf32, #tpu.memory_space<vmem>>, %arg4: memref<4x1xf32, #tpu.memory_space<vmem>>, %arg5: memref<4x1xf32, #tpu.memory_space<vmem>>, %arg6: memref<1x1x4x256xf32, #tpu.memory_space<vmem>>, %arg7: memref<1x4x256xf32, #tpu.memory_space<vmem>>, %arg8: memref<1x4x2xf32, #tpu.memory_space<vmem>>, %arg9: memref<4x418xf32, #tpu.memory_space<vmem>>) attributes {dimension_semantics = [#tpu.dimension_semantics<parallel>, #tpu.dimension_semantics<arbitrary>], iteration_bounds = array<i64: 2, 1>, scalar_prefetch = 0 : i64, scratch_operands = 1 : i64, tpu.core_type = #tpu.core_type<tc>, window_params = [{transform_indices = @transform_0, window_bounds = array<i64: 1, 4, 256>}, {transform_indices = @transform_1, window_bounds = array<i64: 4, 25>}, {transform_indices = @transform_2, window_bounds = array<i64: 4, 1>}, {transform_indices = @transform_3, window_bounds = array<i64: 4, 1>}, {transform_indices = @transform_4, window_bounds = array<i64: 1, 1, 4, 256>}, {transform_indices = @transform_5, window_bounds = array<i64: 1, 4, 256>}, {transform_indices = @transform_6, window_bounds = array<i64: 1, 4, 2>}]} {
    %c0 = arith.constant 0 : index
    %c0_0 = arith.constant 0 : index
    %c0_1 = arith.constant 0 : index
    %0 = vector.load %arg2[%c0, %c0_0, %c0_1] : memref<1x4x256xf32, #tpu.memory_space<vmem>>, vector<1x4x256xf32>
    %1 = vector.shape_cast %0 : vector<1x4x256xf32> to vector<4x256xf32>
    %c0_2 = arith.constant 0 : index
    %c0_3 = arith.constant 0 : index
    %2 = vector.load %arg4[%c0_2, %c0_3] : memref<4x1xf32, #tpu.memory_space<vmem>>, vector<4x1xf32>
    %3 = vector.broadcast %2 : vector<4x1xf32> to vector<4x256xf32>
    %4 = arith.mulf %1, %3 : vector<4x256xf32>
    %c0_4 = arith.constant 0 : index
    %c0_5 = arith.constant 0 : index
    %5 = vector.load %arg5[%c0_4, %c0_5] : memref<4x1xf32, #tpu.memory_space<vmem>>, vector<4x1xf32>
    %6 = vector.broadcast %5 : vector<4x1xf32> to vector<4x256xf32>
    %7 = arith.addf %4, %6 : vector<4x256xf32>
    %cst = arith.constant 0.000000e+00 : f32
    %8 = vector.broadcast %cst : f32 to vector<4x256xf32>
    %9 = arith.subf %8, %7 : vector<4x256xf32>
    %10 = math.exp %9 : vector<4x256xf32>
    %cst_6 = arith.constant 1.000000e+00 : f32
    %11 = vector.broadcast %cst_6 : f32 to vector<4x256xf32>
    %12 = arith.addf %11, %10 : vector<4x256xf32>
    %13 = arith.divf %7, %12 : vector<4x256xf32>
    %c0_7 = arith.constant 0 : index
    %c0_8 = arith.constant 0 : index
    %c0_9 = arith.constant 0 : index
    %c0_10 = arith.constant 0 : index
    %14 = vector.load %arg6[%c0_7, %c0_8, %c0_9, %c0_10] : memref<1x1x4x256xf32, #tpu.memory_space<vmem>>, vector<1x1x4x256xf32>
    %15 = vector.shape_cast %14 : vector<1x1x4x256xf32> to vector<4x256xf32>
    %16 = vector.shape_cast %13 : vector<4x256xf32> to vector<1x1x4x256xf32>
    tpu.vector_store %arg6[%c0_7, %c0_8, %c0_9, %c0_10], %16 {strides = array<i32>} : memref<1x1x4x256xf32, #tpu.memory_space<vmem>>, vector<1x1x4x256xf32>,
    %cst_11 = arith.constant 0.000000e+00 : f32
    %17 = vector.broadcast %cst_11 : f32 to vector<4x128xf32>
    %c0_12 = arith.constant 0 : index
    %c0_13 = arith.constant 0 : index
    %18 = vector.load %arg9[%c0_12, %c0_13] : memref<4x418xf32, #tpu.memory_space<vmem>>, vector<4x128xf32>
    tpu.vector_store %arg9[%c0_12, %c0_13], %17 {strides = array<i32>} : memref<4x418xf32, #tpu.memory_space<vmem>>, vector<4x128xf32>,
    %cst_14 = arith.constant 0.000000e+00 : f32
    %19 = vector.broadcast %cst_14 : f32 to vector<4x34xf32>
    %c0_15 = arith.constant 0 : index
    %c384 = arith.constant 384 : index
    %20 = vector.load %arg9[%c0_15, %c384] : memref<4x418xf32, #tpu.memory_space<vmem>>, vector<4x34xf32>
    tpu.vector_store %arg9[%c0_15, %c384], %19 {strides = array<i32>} : memref<4x418xf32, #tpu.memory_space<vmem>>, vector<4x34xf32>,
    %c0_16 = arith.constant 0 : index
    %c128 = arith.constant 128 : index
    %21 = vector.load %arg9[%c0_16, %c128] : memref<4x418xf32, #tpu.memory_space<vmem>>, vector<4x256xf32>
    tpu.vector_store %arg9[%c0_16, %c128], %13 {strides = array<i32>} : memref<4x418xf32, #tpu.memory_space<vmem>>, vector<4x256xf32>,
    %c0_17 = arith.constant 0 : index
    %c0_18 = arith.constant 0 : index
    %22 = vector.load %arg3[%c0_17, %c0_18] : memref<4x25xf32, #tpu.memory_space<vmem>>, vector<4x25xf32>
    %23 = tpu.iota {dimensions = array<i32: 1>} : vector<1x256xi32>
    %c16_i32 = arith.constant 16 : i32
    %c0_i32 = arith.constant 0 : i32
    %24 = arith.cmpi eq, %c16_i32, %c0_i32 : i32
    %c1_i32 = arith.constant 1 : i32
    %25 = arith.select %24, %c1_i32, %c16_i32 : i32
    %26 = vector.broadcast %25 : i32 to vector<1x256xi32>
    %27 = arith.remsi %23, %26 : vector<1x256xi32>
    %c0_i32_19 = arith.constant 0 : i32
    %28 = vector.broadcast %c0_i32_19 : i32 to vector<1x256xi32>
    %29 = arith.cmpi ne, %27, %28 : vector<1x256xi32>
    %c0_i32_20 = arith.constant 0 : i32
    %30 = vector.broadcast %c0_i32_20 : i32 to vector<1x256xi32>
    %31 = arith.cmpi slt, %27, %30 : vector<1x256xi32>
    %c0_i32_21 = arith.constant 0 : i32
    %32 = arith.cmpi slt, %25, %c0_i32_21 : i32
    %33 = vector.broadcast %32 : i1 to vector<1x256xi1>
    %34 = vector.broadcast %33 : vector<1x256xi1> to vector<1x256xi1>
    %35 = arith.xori %31, %34 : vector<1x256xi1>
    %36 = arith.andi %35, %29 : vector<1x256xi1>
    %37 = vector.broadcast %25 : i32 to vector<1x256xi32>
    %38 = arith.addi %27, %37 : vector<1x256xi32>
    %39 = arith.select %36, %38, %27 : vector<1x256xi1>, vector<1x256xi32>
    %c0_22 = arith.constant 0 : index
    %c94 = arith.constant 94 : index
    %40 = vector.load %arg9[%c0_22, %c94] : memref<4x418xf32, #tpu.memory_space<vmem>>, vector<4x256xf32>
    %41 = vector.extract_strided_slice %22 {offsets = [0, 0], sizes = [4, 1], strides = [1, 1]} : vector<4x25xf32> to vector<4x1xf32>
    %42 = vector.broadcast %41 : vector<4x1xf32> to vector<4x256xf32>
    %43 = arith.mulf %40, %42 : vector<4x256xf32>
    %c0_23 = arith.constant 0 : index
    %c110 = arith.constant 110 : index
    %44 = vector.load %arg9[%c0_23, %c110] : memref<4x418xf32, #tpu.memory_space<vmem>>, vector<4x256xf32>
    %45 = vector.extract_strided_slice %22 {offsets = [0, 5], sizes = [4, 1], strides = [1, 1]} : vector<4x25xf32> to vector<4x1xf32>
    %46 = vector.broadcast %45 : vector<4x1xf32> to vector<4x256xf32>
    %47 = arith.mulf %44, %46 : vector<4x256xf32>
    %48 = arith.addf %43, %47 : vector<4x256xf32>
    %c0_24 = arith.constant 0 : index
    %c126 = arith.constant 126 : index
    %49 = vector.load %arg9[%c0_24, %c126] : memref<4x418xf32, #tpu.memory_space<vmem>>, vector<4x256xf32>
    %50 = vector.extract_strided_slice %22 {offsets = [0, 10], sizes = [4, 1], strides = [1, 1]} : vector<4x25xf32> to vector<4x1xf32>
    %51 = vector.broadcast %50 : vector<4x1xf32> to vector<4x256xf32>
    %52 = arith.mulf %49, %51 : vector<4x256xf32>
    %53 = arith.addf %48, %52 : vector<4x256xf32>
    %c0_25 = arith.constant 0 : index
    %c142 = arith.constant 142 : index
    %54 = vector.load %arg9[%c0_25, %c142] : memref<4x418xf32, #tpu.memory_space<vmem>>, vector<4x256xf32>
    %55 = vector.extract_strided_slice %22 {offsets = [0, 15], sizes = [4, 1], strides = [1, 1]} : vector<4x25xf32> to vector<4x1xf32>
    %56 = vector.broadcast %55 : vector<4x1xf32> to vector<4x256xf32>
    %57 = arith.mulf %54, %56 : vector<4x256xf32>
    %58 = arith.addf %53, %57 : vector<4x256xf32>
    %c0_26 = arith.constant 0 : index
    %c158 = arith.constant 158 : index
    %59 = vector.load %arg9[%c0_26, %c158] : memref<4x418xf32, #tpu.memory_space<vmem>>, vector<4x256xf32>
    %60 = vector.extract_strided_slice %22 {offsets = [0, 20], sizes = [4, 1], strides = [1, 1]} : vector<4x25xf32> to vector<4x1xf32>
    %61 = vector.broadcast %60 : vector<4x1xf32> to vector<4x256xf32>
    %62 = arith.mulf %59, %61 : vector<4x256xf32>
    %63 = arith.addf %58, %62 : vector<4x256xf32>
    %c2_i32 = arith.constant 2 : i32
    %64 = vector.broadcast %c2_i32 : i32 to vector<1x256xi32>
    %65 = arith.cmpi sge, %39, %64 : vector<1x256xi32>
    %cst_27 = arith.constant 0.000000e+00 : f32
    %66 = vector.shape_cast %65 : vector<1x256xi1> to vector<1x256xi1>
    %67 = vector.broadcast %66 : vector<1x256xi1> to vector<4x256xi1>
    %68 = vector.broadcast %cst_27 : f32 to vector<4x256xf32>
    %69 = arith.select %67, %63, %68 : vector<4x256xi1>, vector<4x256xf32>
    %c0_28 = arith.constant 0 : index
    %c95 = arith.constant 95 : index
    %70 = vector.load %arg9[%c0_28, %c95] : memref<4x418xf32, #tpu.memory_space<vmem>>, vector<4x256xf32>
    %71 = vector.extract_strided_slice %22 {offsets = [0, 1], sizes = [4, 1], strides = [1, 1]} : vector<4x25xf32> to vector<4x1xf32>
    %72 = vector.broadcast %71 : vector<4x1xf32> to vector<4x256xf32>
    %73 = arith.mulf %70, %72 : vector<4x256xf32>
    %c0_29 = arith.constant 0 : index
    %c111 = arith.constant 111 : index
    %74 = vector.load %arg9[%c0_29, %c111] : memref<4x418xf32, #tpu.memory_space<vmem>>, vector<4x256xf32>
    %75 = vector.extract_strided_slice %22 {offsets = [0, 6], sizes = [4, 1], strides = [1, 1]} : vector<4x25xf32> to vector<4x1xf32>
    %76 = vector.broadcast %75 : vector<4x1xf32> to vector<4x256xf32>
    %77 = arith.mulf %74, %76 : vector<4x256xf32>
    %78 = arith.addf %73, %77 : vector<4x256xf32>
    %c0_30 = arith.constant 0 : index
    %c127 = arith.constant 127 : index
    %79 = vector.load %arg9[%c0_30, %c127] : memref<4x418xf32, #tpu.memory_space<vmem>>, vector<4x256xf32>
    %80 = vector.extract_strided_slice %22 {offsets = [0, 11], sizes = [4, 1], strides = [1, 1]} : vector<4x25xf32> to vector<4x1xf32>
    %81 = vector.broadcast %80 : vector<4x1xf32> to vector<4x256xf32>
    %82 = arith.mulf %79, %81 : vector<4x256xf32>
    %83 = arith.addf %78, %82 : vector<4x256xf32>
    %c0_31 = arith.constant 0 : index
    %c143 = arith.constant 143 : index
    %84 = vector.load %arg9[%c0_31, %c143] : memref<4x418xf32, #tpu.memory_space<vmem>>, vector<4x256xf32>
    %85 = vector.extract_strided_slice %22 {offsets = [0, 16], sizes = [4, 1], strides = [1, 1]} : vector<4x25xf32> to vector<4x1xf32>
    %86 = vector.broadcast %85 : vector<4x1xf32> to vector<4x256xf32>
    %87 = arith.mulf %84, %86 : vector<4x256xf32>
    %88 = arith.addf %83, %87 : vector<4x256xf32>
    %c0_32 = arith.constant 0 : index
    %c159 = arith.constant 159 : index
    %89 = vector.load %arg9[%c0_32, %c159] : memref<4x418xf32, #tpu.memory_space<vmem>>, vector<4x256xf32>
    %90 = vector.extract_strided_slice %22 {offsets = [0, 21], sizes = [4, 1], strides = [1, 1]} : vector<4x25xf32> to vector<4x1xf32>
    %91 = vector.broadcast %90 : vector<4x1xf32> to vector<4x256xf32>
    %92 = arith.mulf %89, %91 : vector<4x256xf32>
    %93 = arith.addf %88, %92 : vector<4x256xf32>
    %c1_i32_33 = arith.constant 1 : i32
    %94 = vector.broadcast %c1_i32_33 : i32 to vector<1x256xi32>
    %95 = arith.cmpi sge, %39, %94 : vector<1x256xi32>
    %cst_34 = arith.constant 0.000000e+00 : f32
    %96 = vector.shape_cast %95 : vector<1x256xi1> to vector<1x256xi1>
    %97 = vector.broadcast %96 : vector<1x256xi1> to vector<4x256xi1>
    %98 = vector.broadcast %cst_34 : f32 to vector<4x256xf32>
    %99 = arith.select %97, %93, %98 : vector<4x256xi1>, vector<4x256xf32>
    %100 = arith.addf %69, %99 : vector<4x256xf32>
    %c0_35 = arith.constant 0 : index
    %c96 = arith.constant 96 : index
    %101 = vector.load %arg9[%c0_35, %c96] : memref<4x418xf32, #tpu.memory_space<vmem>>, vector<4x256xf32>
    %102 = vector.extract_strided_slice %22 {offsets = [0, 2], sizes = [4, 1], strides = [1, 1]} : vector<4x25xf32> to vector<4x1xf32>
    %103 = vector.broadcast %102 : vector<4x1xf32> to vector<4x256xf32>
    %104 = arith.mulf %101, %103 : vector<4x256xf32>
    %c0_36 = arith.constant 0 : index
    %c112 = arith.constant 112 : index
    %105 = vector.load %arg9[%c0_36, %c112] : memref<4x418xf32, #tpu.memory_space<vmem>>, vector<4x256xf32>
    %106 = vector.extract_strided_slice %22 {offsets = [0, 7], sizes = [4, 1], strides = [1, 1]} : vector<4x25xf32> to vector<4x1xf32>
    %107 = vector.broadcast %106 : vector<4x1xf32> to vector<4x256xf32>
    %108 = arith.mulf %105, %107 : vector<4x256xf32>
    %109 = arith.addf %104, %108 : vector<4x256xf32>
    %c0_37 = arith.constant 0 : index
    %c128_38 = arith.constant 128 : index
    %110 = vector.load %arg9[%c0_37, %c128_38] : memref<4x418xf32, #tpu.memory_space<vmem>>, vector<4x256xf32>
    %111 = vector.extract_strided_slice %22 {offsets = [0, 12], sizes = [4, 1], strides = [1, 1]} : vector<4x25xf32> to vector<4x1xf32>
    %112 = vector.broadcast %111 : vector<4x1xf32> to vector<4x256xf32>
    %113 = arith.mulf %110, %112 : vector<4x256xf32>
    %114 = arith.addf %109, %113 : vector<4x256xf32>
    %c0_39 = arith.constant 0 : index
    %c144 = arith.constant 144 : index
    %115 = vector.load %arg9[%c0_39, %c144] : memref<4x418xf32, #tpu.memory_space<vmem>>, vector<4x256xf32>
    %116 = vector.extract_strided_slice %22 {offsets = [0, 17], sizes = [4, 1], strides = [1, 1]} : vector<4x25xf32> to vector<4x1xf32>
    %117 = vector.broadcast %116 : vector<4x1xf32> to vector<4x256xf32>
    %118 = arith.mulf %115, %117 : vector<4x256xf32>
    %119 = arith.addf %114, %118 : vector<4x256xf32>
    %c0_40 = arith.constant 0 : index
    %c160 = arith.constant 160 : index
    %120 = vector.load %arg9[%c0_40, %c160] : memref<4x418xf32, #tpu.memory_space<vmem>>, vector<4x256xf32>
    %121 = vector.extract_strided_slice %22 {offsets = [0, 22], sizes = [4, 1], strides = [1, 1]} : vector<4x25xf32> to vector<4x1xf32>
    %122 = vector.broadcast %121 : vector<4x1xf32> to vector<4x256xf32>
    %123 = arith.mulf %120, %122 : vector<4x256xf32>
    %124 = arith.addf %119, %123 : vector<4x256xf32>
    %125 = arith.addf %100, %124 : vector<4x256xf32>
    %c0_41 = arith.constant 0 : index
    %c97 = arith.constant 97 : index
    %126 = vector.load %arg9[%c0_41, %c97] : memref<4x418xf32, #tpu.memory_space<vmem>>, vector<4x256xf32>
    %127 = vector.extract_strided_slice %22 {offsets = [0, 3], sizes = [4, 1], strides = [1, 1]} : vector<4x25xf32> to vector<4x1xf32>
    %128 = vector.broadcast %127 : vector<4x1xf32> to vector<4x256xf32>
    %129 = arith.mulf %126, %128 : vector<4x256xf32>
    %c0_42 = arith.constant 0 : index
    %c113 = arith.constant 113 : index
    %130 = vector.load %arg9[%c0_42, %c113] : memref<4x418xf32, #tpu.memory_space<vmem>>, vector<4x256xf32>
    %131 = vector.extract_strided_slice %22 {offsets = [0, 8], sizes = [4, 1], strides = [1, 1]} : vector<4x25xf32> to vector<4x1xf32>
    %132 = vector.broadcast %131 : vector<4x1xf32> to vector<4x256xf32>
    %133 = arith.mulf %130, %132 : vector<4x256xf32>
    %134 = arith.addf %129, %133 : vector<4x256xf32>
    %c0_43 = arith.constant 0 : index
    %c129 = arith.constant 129 : index
    %135 = vector.load %arg9[%c0_43, %c129] : memref<4x418xf32, #tpu.memory_space<vmem>>, vector<4x256xf32>
    %136 = vector.extract_strided_slice %22 {offsets = [0, 13], sizes = [4, 1], strides = [1, 1]} : vector<4x25xf32> to vector<4x1xf32>
    %137 = vector.broadcast %136 : vector<4x1xf32> to vector<4x256xf32>
    %138 = arith.mulf %135, %137 : vector<4x256xf32>
    %139 = arith.addf %134, %138 : vector<4x256xf32>
    %c0_44 = arith.constant 0 : index
    %c145 = arith.constant 145 : index
    %140 = vector.load %arg9[%c0_44, %c145] : memref<4x418xf32, #tpu.memory_space<vmem>>, vector<4x256xf32>
    %141 = vector.extract_strided_slice %22 {offsets = [0, 18], sizes = [4, 1], strides = [1, 1]} : vector<4x25xf32> to vector<4x1xf32>
    %142 = vector.broadcast %141 : vector<4x1xf32> to vector<4x256xf32>
    %143 = arith.mulf %140, %142 : vector<4x256xf32>
    %144 = arith.addf %139, %143 : vector<4x256xf32>
    %c0_45 = arith.constant 0 : index
    %c161 = arith.constant 161 : index
    %145 = vector.load %arg9[%c0_45, %c161] : memref<4x418xf32, #tpu.memory_space<vmem>>, vector<4x256xf32>
    %146 = vector.extract_strided_slice %22 {offsets = [0, 23], sizes = [4, 1], strides = [1, 1]} : vector<4x25xf32> to vector<4x1xf32>
    %147 = vector.broadcast %146 : vector<4x1xf32> to vector<4x256xf32>
    %148 = arith.mulf %145, %147 : vector<4x256xf32>
    %149 = arith.addf %144, %148 : vector<4x256xf32>
    %c15_i32 = arith.constant 15 : i32
    %150 = vector.broadcast %c15_i32 : i32 to vector<1x256xi32>
    %151 = arith.cmpi slt, %39, %150 : vector<1x256xi32>
    %cst_46 = arith.constant 0.000000e+00 : f32
    %152 = vector.shape_cast %151 : vector<1x256xi1> to vector<1x256xi1>
    %153 = vector.broadcast %152 : vector<1x256xi1> to vector<4x256xi1>
    %154 = vector.broadcast %cst_46 : f32 to vector<4x256xf32>
    %155 = arith.select %153, %149, %154 : vector<4x256xi1>, vector<4x256xf32>
    %156 = arith.addf %125, %155 : vector<4x256xf32>
    %c0_47 = arith.constant 0 : index
    %c98 = arith.constant 98 : index
    %157 = vector.load %arg9[%c0_47, %c98] : memref<4x418xf32, #tpu.memory_space<vmem>>, vector<4x256xf32>
    %158 = vector.extract_strided_slice %22 {offsets = [0, 4], sizes = [4, 1], strides = [1, 1]} : vector<4x25xf32> to vector<4x1xf32>
    %159 = vector.broadcast %158 : vector<4x1xf32> to vector<4x256xf32>
    %160 = arith.mulf %157, %159 : vector<4x256xf32>
    %c0_48 = arith.constant 0 : index
    %c114 = arith.constant 114 : index
    %161 = vector.load %arg9[%c0_48, %c114] : memref<4x418xf32, #tpu.memory_space<vmem>>, vector<4x256xf32>
    %162 = vector.extract_strided_slice %22 {offsets = [0, 9], sizes = [4, 1], strides = [1, 1]} : vector<4x25xf32> to vector<4x1xf32>
    %163 = vector.broadcast %162 : vector<4x1xf32> to vector<4x256xf32>
    %164 = arith.mulf %161, %163 : vector<4x256xf32>
    %165 = arith.addf %160, %164 : vector<4x256xf32>
    %c0_49 = arith.constant 0 : index
    %c130 = arith.constant 130 : index
    %166 = vector.load %arg9[%c0_49, %c130] : memref<4x418xf32, #tpu.memory_space<vmem>>, vector<4x256xf32>
    %167 = vector.extract_strided_slice %22 {offsets = [0, 14], sizes = [4, 1], strides = [1, 1]} : vector<4x25xf32> to vector<4x1xf32>
    %168 = vector.broadcast %167 : vector<4x1xf32> to vector<4x256xf32>
    %169 = arith.mulf %166, %168 : vector<4x256xf32>
    %170 = arith.addf %165, %169 : vector<4x256xf32>
    %c0_50 = arith.constant 0 : index
    %c146 = arith.constant 146 : index
    %171 = vector.load %arg9[%c0_50, %c146] : memref<4x418xf32, #tpu.memory_space<vmem>>, vector<4x256xf32>
    %172 = vector.extract_strided_slice %22 {offsets = [0, 19], sizes = [4, 1], strides = [1, 1]} : vector<4x25xf32> to vector<4x1xf32>
    %173 = vector.broadcast %172 : vector<4x1xf32> to vector<4x256xf32>
    %174 = arith.mulf %171, %173 : vector<4x256xf32>
    %175 = arith.addf %170, %174 : vector<4x256xf32>
    %c0_51 = arith.constant 0 : index
    %c162 = arith.constant 162 : index
    %176 = vector.load %arg9[%c0_51, %c162] : memref<4x418xf32, #tpu.memory_space<vmem>>, vector<4x256xf32>
    %177 = vector.extract_strided_slice %22 {offsets = [0, 24], sizes = [4, 1], strides = [1, 1]} : vector<4x25xf32> to vector<4x1xf32>
    %178 = vector.broadcast %177 : vector<4x1xf32> to vector<4x256xf32>
    %179 = arith.mulf %176, %178 : vector<4x256xf32>
    %180 = arith.addf %175, %179 : vector<4x256xf32>
    %c14_i32 = arith.constant 14 : i32
    %181 = vector.broadcast %c14_i32 : i32 to vector<1x256xi32>
    %182 = arith.cmpi slt, %39, %181 : vector<1x256xi32>
    %cst_52 = arith.constant 0.000000e+00 : f32
    %183 = vector.shape_cast %182 : vector<1x256xi1> to vector<1x256xi1>
    %184 = vector.broadcast %183 : vector<1x256xi1> to vector<4x256xi1>
    %185 = vector.broadcast %cst_52 : f32 to vector<4x256xf32>
    %186 = arith.select %184, %180, %185 : vector<4x256xi1>, vector<4x256xf32>
    %187 = arith.addf %156, %186 : vector<4x256xf32>
    %c0_53 = arith.constant 0 : index
    %c0_54 = arith.constant 0 : index
    %c0_55 = arith.constant 0 : index
    %188 = vector.load %arg7[%c0_53, %c0_54, %c0_55] : memref<1x4x256xf32, #tpu.memory_space<vmem>>, vector<1x4x256xf32>
    %189 = vector.shape_cast %188 : vector<1x4x256xf32> to vector<4x256xf32>
    %190 = vector.shape_cast %187 : vector<4x256xf32> to vector<1x4x256xf32>
    tpu.vector_store %arg7[%c0_53, %c0_54, %c0_55], %190 {strides = array<i32>} : memref<1x4x256xf32, #tpu.memory_space<vmem>>, vector<1x4x256xf32>,
    %c0_i32_56 = arith.constant 0 : i32
    %191 = arith.cmpi eq, %arg1, %c0_i32_56 : i32
    %192 = arith.extui %191 : i1 to i32
    %c0_i32_57 = arith.constant 0 : i32
    %193 = arith.cmpi ne, %192, %c0_i32_57 : i32
    scf.if %193 {
      %cst_65 = arith.constant 0.000000e+00 : f32
      %205 = vector.broadcast %cst_65 : f32 to vector<1x4x2xf32>
      %c0_66 = arith.constant 0 : index
      %c0_67 = arith.constant 0 : index
      %c0_68 = arith.constant 0 : index
      %206 = vector.load %arg8[%c0_66, %c0_67, %c0_68] : memref<1x4x2xf32, #tpu.memory_space<vmem>>, vector<1x4x2xf32>
      tpu.vector_store %arg8[%c0_66, %c0_67, %c0_68], %205 {strides = array<i32>} : memref<1x4x2xf32, #tpu.memory_space<vmem>>, vector<1x4x2xf32>,
    } else {
    }
    %cst_58 = arith.constant dense<0.000000e+00> : vector<4xf32>
    %194 = vector.multi_reduction <add>, %187, %cst_58 [1] : vector<4x256xf32> to vector<4xf32>
    %195 = vector.shape_cast %194 : vector<4xf32> to vector<4x1xf32>
    %196 = arith.mulf %187, %187 : vector<4x256xf32>
    %cst_59 = arith.constant dense<0.000000e+00> : vector<4xf32>
    %197 = vector.multi_reduction <add>, %196, %cst_59 [1] : vector<4x256xf32> to vector<4xf32>
    %198 = vector.shape_cast %197 : vector<4xf32> to vector<4x1xf32>
    %c0_60 = arith.constant 0 : index
    %c0_61 = arith.constant 0 : index
    %c0_62 = arith.constant 0 : index
    %199 = vector.load %arg8[%c0_60, %c0_61, %c0_62] : memref<1x4x2xf32, #tpu.memory_space<vmem>>, vector<1x4x1xf32>
    %200 = vector.shape_cast %199 : vector<1x4x1xf32> to vector<4x1xf32>
    %201 = vector.shape_cast %195 : vector<4x1xf32> to vector<1x4x1xf32>
    tpu.vector_store %arg8[%c0_60, %c0_61, %c0_62], %201 {strides = array<i32>} : memref<1x4x2xf32, #tpu.memory_space<vmem>>, vector<1x4x1xf32>,
    %c0_63 = arith.constant 0 : index
    %c0_64 = arith.constant 0 : index
    %c1 = arith.constant 1 : index
    %202 = vector.load %arg8[%c0_63, %c0_64, %c1] : memref<1x4x2xf32, #tpu.memory_space<vmem>>, vector<1x4x1xf32>
    %203 = vector.shape_cast %202 : vector<1x4x1xf32> to vector<4x1xf32>
    %204 = vector.shape_cast %198 : vector<4x1xf32> to vector<1x4x1xf32>
    tpu.vector_store %arg8[%c0_63, %c0_64, %c1], %204 {strides = array<i32>} : memref<1x4x2xf32, #tpu.memory_space<vmem>>, vector<1x4x1xf32>,
    return
  }
  func.func @transform_0(%arg0: i32, %arg1: i32) -> (i32, i32, i32) {
    %c0_i32 = arith.constant 0 : i32
    %c0_i32_0 = arith.constant 0 : i32
    return %arg0, %arg1, %c0_i32 : i32, i32, i32
  }
  func.func @transform_1(%arg0: i32, %arg1: i32) -> (i32, i32) {
    %c0_i32 = arith.constant 0 : i32
    %c0_i32_0 = arith.constant 0 : i32
    return %arg1, %c0_i32 : i32, i32
  }
  func.func @transform_2(%arg0: i32, %arg1: i32) -> (i32, i32) {
    %c0_i32 = arith.constant 0 : i32
    %c0_i32_0 = arith.constant 0 : i32
    return %arg1, %c0_i32 : i32, i32
  }
  func.func @transform_3(%arg0: i32, %arg1: i32) -> (i32, i32) {
    %c0_i32 = arith.constant 0 : i32
    %c0_i32_0 = arith.constant 0 : i32
    return %arg1, %c0_i32 : i32, i32
  }
  func.func @transform_4(%arg0: i32, %arg1: i32) -> (i32, i32, i32, i32) {
    %c0_i32 = arith.constant 0 : i32
    %c0_i32_0 = arith.constant 0 : i32
    %c0_i32_1 = arith.constant 0 : i32
    return %arg0, %c0_i32, %arg1, %c0_i32_0 : i32, i32, i32, i32
  }
  func.func @transform_5(%arg0: i32, %arg1: i32) -> (i32, i32, i32) {
    %c0_i32 = arith.constant 0 : i32
    %c0_i32_0 = arith.constant 0 : i32
    return %arg0, %arg1, %c0_i32 : i32, i32, i32
  }
  func.func @transform_6(%arg0: i32, %arg1: i32) -> (i32, i32, i32) {
    %c0_i32 = arith.constant 0 : i32
    %c0_i32_0 = arith.constant 0 : i32
    %c0_i32_1 = arith.constant 0 : i32
    return %arg0, %c0_i32, %c0_i32_0 : i32, i32, i32
  }
}

</mosaic_0001>

<llo_original>
// kernel: ghost_conv.3
$region0: #{ghost_conv.3}
  #allocation0 [shape = 'u32[]', space=smem, size = 0x4, offset = 0x4, fixed_abs, tag = 'smem constant byte address 0x4 - core index']
  #allocation1 [shape = 'u32[144,128]{1,0:T(1,128)}', space=vmem, size = 0x12000, scoped, tag = 'internal scratch']
  %s0 = inlined_call_operand.vmem [shape: f32[2,4,256], index: 0, kind: input, shape index: {}]
  %s1 = inlined_call_operand.vmem [shape: f32[4,4], index: 1, kind: input, shape index: {}]
  %s2 = inlined_call_operand.vmem [shape: f32[2,4,256], index: 2, kind: output, shape index: {0}]
  %s3 = inlined_call_operand.vmem [shape: f32[2,4,2], index: 3, kind: output, shape index: {1}]
  %4 = xla_tuple %s2, %s3
  %s5 = sld [smem:[#allocation0]]
  $region53: #{ghost_conv.3} parent=0
    _
  %s7 = ssub.s32 1, %s5
  %s8 = scalar_select 0, %s7, %s5
  loop: start=0, step=1, limit=4
  $region2: #{ghost_conv.3} parent=0 // loop_pre_header
    _
  $region3: #{ghost_conv.3} parent=0 // loop_header
    %s10 = sphi 0, %s14
    %p11 = scmp.ge.s32.totalorder %s10, 4
    %s17 = sphi 0, %s29
    %s18 = sphi 0, %s25
    %s19 = sphi 0, %s17
    %s20 = sphi 0, %s18
    %s21 = sphi 0, %s19
    %s22 = sphi 0, %s20
    %s34 = sphi 0, %s36
    %s37 = sphi 0, %s34
    %s38 = sphi 0, %s37
    %s54 = sphi 0, %s38
    %s58 = sphi 0, %s58
    %s60 = sphi 0, %s58
    %s61 = sphi 0, %s60
    %s75 = sphi 0, %s61
    %s83 = sphi 0, %s85
    %s86 = sphi 0, %s83
    %s87 = sphi 0, %s86
    %s103 = sphi 0, %s87
    %s109 = sphi 0, %s111
    %s112 = sphi 0, %s109
    %s113 = sphi 0, %s112
    %s129 = sphi 0, %s113
  $region4: #{ghost_conv.3} parent=0 // loop_header_branch
    %13 = sbr.rel (%p11) target = $region8
  $region5: #{ghost_conv.3} parent=0 // loop_body
    %s15 = ssub.s32 %s10, 1
    %s16 = ssub.s32 %s10, 2
    %s23 = sadd.s32 1, %s18
    %p24 = scmp.ge.s32.totalorder %s23, 1
    %s25 = scalar_select %p24, 0, %s23
    %s26 = sadd.s32 1, %s17
    %s27 = scalar_select %p24, %s26, %s17
    %p28 = scmp.ge.s32.totalorder %s27, 2
    %s29 = scalar_select %p28, 0, %s27
    %s30 = ssub.s32 %s17, %s29
    %s31 = ssub.s32 %s18, %s25
    %s32 = sor.u32 %s30, %s31
    %p33 = scmp.eq.s32.totalorder %s32, 0
    %s35 = sadd.s32 %s34, 1
    %s36 = scalar_select %p33, %s34, %s35
    %p39 = pneg %p33
    %p40 = scmp.eq.s32.totalorder %s10, 1
    %p41 = por %p39, %p40
    %p42 = scmp.ne.s32.totalorder %s34, %s37
    %p43 = scmp.eq.s32.totalorder %s10, 0
    %p44 = por %p42, %p43
    %p45 = scmp.ne.s32.totalorder %s34, %s37
    %p46 = scmp.eq.s32.totalorder %s15, 1
    %p47 = por %p45, %p46
    %p48 = scmp.ne.s32.totalorder %s37, %s38
    %p49 = scmp.eq.s32.totalorder %s15, 0
    %p50 = por %p48, %p49
    %p51 = scmp.ne.s32.totalorder %s37, %s38
    %p52 = scmp.eq.s32.totalorder %s16, 1
    %p53 = por %p51, %p52
    %p55 = scmp.ne.s32.totalorder %s38, %s54
    %p56 = scmp.eq.s32.totalorder %s16, 0
    %p57 = por %p55, %p56
    %s59 = sadd.s32 %s58, 1
    %p62 = scmp.eq.s32.totalorder %s10, 1
    %p63 = scmp.ne.s32.totalorder %s58, %s60
    %p64 = scmp.eq.s32.totalorder %s10, 0
    %p65 = por %p63, %p64
    %p66 = scmp.ne.s32.totalorder %s58, %s60
    %p67 = scmp.eq.s32.totalorder %s15, 1
    %p68 = por %p66, %p67
    %p69 = scmp.ne.s32.totalorder %s60, %s61
    %p70 = scmp.eq.s32.totalorder %s15, 0
    %p71 = por %p69, %p70
    %p72 = scmp.ne.s32.totalorder %s60, %s61
    %p73 = scmp.eq.s32.totalorder %s16, 1
    %p74 = por %p72, %p73
    %p76 = scmp.ne.s32.totalorder %s61, %s75
    %p77 = scmp.eq.s32.totalorder %s16, 0
    %p78 = por %p76, %p77
    %s79 = ssub.s32 %s17, %s29
    %s80 = ssub.s32 %s18, %s25
    %s81 = sor.u32 %s79, %s80
    %p82 = scmp.eq.s32.totalorder %s81, 0
    %s84 = sadd.s32 %s83, 1
    %s85 = scalar_select %p82, %s83, %s84
    %p88 = pneg %p82
    %p89 = scmp.eq.s32.totalorder %s10, 1
    %p90 = por %p88, %p89
    %p91 = scmp.ne.s32.totalorder %s83, %s86
    %p92 = scmp.eq.s32.totalorder %s10, 0
    %p93 = por %p91, %p92
    %p94 = scmp.ne.s32.totalorder %s83, %s86
    %p95 = scmp.eq.s32.totalorder %s15, 1
    %p96 = por %p94, %p95
    %p97 = scmp.ne.s32.totalorder %s86, %s87
    %p98 = scmp.eq.s32.totalorder %s15, 0
    %p99 = por %p97, %p98
    %p100 = scmp.ne.s32.totalorder %s86, %s87
    %p101 = scmp.eq.s32.totalorder %s16, 1
    %p102 = por %p100, %p101
    %p104 = scmp.ne.s32.totalorder %s87, %s103
    %p105 = scmp.eq.s32.totalorder %s16, 0
    %p106 = por %p104, %p105
    %s107 = ssub.s32 %s17, %s29
    %p108 = scmp.eq.s32.totalorder %s107, 0
    %s110 = sadd.s32 %s109, 1
    %s111 = scalar_select %p108, %s109, %s110
    %p114 = pneg %p108
    %p115 = scmp.eq.s32.totalorder %s10, 1
    %p116 = por %p114, %p115
    %p117 = scmp.ne.s32.totalorder %s109, %s112
    %p118 = scmp.eq.s32.totalorder %s10, 0
    %p119 = por %p117, %p118
    %p120 = scmp.ne.s32.totalorder %s109, %s112
    %p121 = scmp.eq.s32.totalorder %s15, 1
    %p122 = por %p120, %p121
    %p123 = scmp.ne.s32.totalorder %s112, %s113
    %p124 = scmp.eq.s32.totalorder %s15, 0
    %p125 = por %p123, %p124
    %p126 = scmp.ne.s32.totalorder %s112, %s113
    %p127 = scmp.eq.s32.totalorder %s16, 1
    %p128 = por %p126, %p127
    %p130 = scmp.ne.s32.totalorder %s113, %s129
    %p131 = scmp.eq.s32.totalorder %s16, 0
    %p132 = por %p130, %p131
    %p133 = scmp.le.s32.totalorder 1, %s10
    %p134 = scmp.lt.s32.totalorder %s10, 3
    %p135 = pnand %p133, %p134
    %p136 = pneg %p135
    // Predicated region
    $region9: #{ghost_conv.3} parent=5 // pred_check
      _
    $region10: #{ghost_conv.3} parent=5 // pred_check_branch
      %138 = sbr.rel (%p135) target = $region12
    $region11: #{ghost_conv.3} parent=5 // pred_region
      %s139 = ssub.s32 %s10, 1
      // Predicated region
      $region13: #{ghost_conv.3} parent=11 // pred_check
        %p140 = pneg %p71
      $region14: #{ghost_conv.3} parent=11 // pred_check_branch
        %142 = sbr.rel (%p140) target = $region16
      $region15: #{ghost_conv.3} parent=11 // pred_region
        _
      $region16: #{ghost_conv.3} parent=11 // pred_fallthru
        _
    $region12: #{ghost_conv.3} parent=5 // pred_fallthru
      _
    %p143 = scmp.lt.s32.totalorder %s10, 2
    // Predicated region
    $region17: #{ghost_conv.3} parent=5 // pred_check
      %p144 = pneg %p143
    $region18: #{ghost_conv.3} parent=5 // pred_check_branch
      %146 = sbr.rel (%p144) target = $region20
    $region19: #{ghost_conv.3} parent=5 // pred_region
      // Predicated region
      $region21: #{ghost_conv.3} parent=19 // pred_check
        %p147 = pneg %p44
      $region22: #{ghost_conv.3} parent=19 // pred_check_branch
        %149 = sbr.rel (%p147) target = $region24
      $region23: #{ghost_conv.3} parent=19 // pred_region
        %s150 = smul.u32 2, %s18
        %p151 = scmp.lt.s32.totalorder %s17, 1
        %s152 = scalar_select %p151, %s17, 1
        %p153 = scmp.lt.s32.totalorder %s150, 1
        %s154 = scalar_select %p153, %s150, 1
        %s155 = smul.addr %s152, 2
        %s156 = sadd.s32 %s154, %s155
        %s157 = smul.addr %s156, 4
        %s158 = scalar_lea.vmem %s0, %s157
        %s159 = smul.u32 2, %s18
      $region24: #{ghost_conv.3} parent=19 // pred_fallthru
        _
    $region20: #{ghost_conv.3} parent=5 // pred_fallthru
      _
    %p160 = scmp.le.s32.totalorder 1, %s10
    %p161 = scmp.lt.s32.totalorder %s10, 3
    %p162 = pnand %p160, %p161
    %p163 = pneg %p162
    // Predicated region
    $region25: #{ghost_conv.3} parent=5 // pred_check
      _
    $region26: #{ghost_conv.3} parent=5 // pred_check_branch
      %165 = sbr.rel (%p162) target = $region28
    $region27: #{ghost_conv.3} parent=5 // pred_region
      %s166 = ssub.s32 %s10, 1
      %s167 = smul.u32 2, %s20
      %p168 = scmp.lt.s32.totalorder %s19, 1
      %s169 = scalar_select %p168, %s19, 1
      %p170 = scmp.lt.s32.totalorder %s167, 1
      %s171 = scalar_select %p170, %s167, 1
      %s172 = smul.addr %s169, 2
      %s173 = sadd.s32 %s171, %s172
      %s174 = smul.addr %s173, 4
      %s175 = scalar_lea.vmem %s0, %s174
      %p176 = pneg %p50
      %p177 = pneg %p47
      %p178 = pneg %p71
      %p179 = pneg %p68
      %p180 = pneg %p99
      %p181 = pneg %p96
      %s182 = smul.u32 2, %s20
      %p183 = scmp.lt.s32.totalorder %s19, 1
      %s184 = scalar_select %p183, %s19, 1
      %p185 = scmp.lt.s32.totalorder %s182, 1
      %s186 = scalar_select %p185, %s182, 1
      %s187 = smul.addr %s184, 2
      %s188 = sadd.s32 %s186, %s187
      %s189 = smul.addr %s188, 4
      %s190 = scalar_lea.vmem %s2, %s189
      %p191 = pneg %p125
      %p192 = pneg %p122
      %p193 = scmp.lt.s32.totalorder %s19, 1
      %s194 = scalar_select %p193, %s19, 1
      %s195 = smul.addr %s194, 4
      %s196 = scalar_lea.vmem %s3, %s195
      %s197 = smul.u32 2, %s20
      %p198 = scmp.lt.s32.totalorder %s19, 1
      %s199 = scalar_select %p198, %s19, 1
      %p200 = scmp.lt.s32.totalorder %s197, 1
      %s201 = scalar_select %p200, %s197, 1
      %s202 = smul.addr %s199, 2
      %s203 = sadd.s32 %s201, %s202
      %s204 = smul.addr %s203, 4
      %s205 = scalar_lea.vmem %s0, %s204
      %s206 = smul.u32 2, %s20
      %s207 = smul.u32 2, %s20
      %p208 = scmp.lt.s32.totalorder %s19, 1
      %s209 = scalar_select %p208, %s19, 1
      %p210 = scmp.lt.s32.totalorder %s207, 1
      %s211 = scalar_select %p210, %s207, 1
      %s212 = smul.addr %s209, 2
      %s213 = sadd.s32 %s211, %s212
      %s214 = smul.addr %s213, 4
      %s215 = scalar_lea.vmem %s2, %s214
      %s216 = smul.u32 2, %s20
      %p217 = scmp.lt.s32.totalorder %s19, 1
      %s218 = scalar_select %p217, %s19, 1
      %s219 = smul.addr %s218, 4
      %s220 = scalar_lea.vmem %s3, %s219
      %v221 = vld [vmem:[%s205] sm:$0xff]
      %v222 = vld [vmem:[%s1] sm:$0xf]
      %224 = vset.pattern.permute.xlu0 0
      %225 = vperm.xlu0 %224, %v222
      %v226 = vpop.permute.xlu0 %225
      %v229 = vlaneseq
      %v230 = vshrl.u32 %v229, 7
      %v231 = vsub.s32 0, %v230
      %v232 = vrot.slane %v221, %v231
      %v233 = vlaneseq
      %v234 = vshrl.u32 %v233, 7
      %v235 = vsub.s32 4, %v234
      %v236 = vrot.slane %v221, %v235
      %v239 = vlaneseq
      %v240 = vshrl.u32 %v239, 7
      %v241 = vsub.s32 0, %v240
      %v242 = vrot.slane %v232, %v241
      %v243 = vlaneseq
      %v244 = vshrl.u32 %v243, 7
      %v245 = vsub.s32 0, %v244
      %v246 = vrot.slane %v236, %v245
      %v247 = vmul.f32 %v226, %v242
      %v248 = vmul.f32 %v226, %v246
      %249 = vset.pattern.permute.xlu0 1
      %250 = vperm.xlu0 %249, %v222
      %v251 = vpop.permute.xlu0 %250
      %v253 = vlaneseq
      %v254 = vshrl.u32 %v253, 7
      %v255 = vsub.s32 1, %v254
      %v256 = vrot.slane %v221, %v255
      %v257 = vlaneseq
      %v258 = vshrl.u32 %v257, 7
      %v259 = vsub.s32 5, %v258
      %v260 = vrot.slane %v221, %v259
      %v263 = vlaneseq
      %v264 = vshrl.u32 %v263, 7
      %v265 = vsub.s32 1, %v264
      %v266 = vrot.slane %v256, %v265
      %v267 = vlaneseq
      %v268 = vshrl.u32 %v267, 7
      %v269 = vsub.s32 1, %v268
      %v270 = vrot.slane %v260, %v269
      %v271 = vmul.f32 %v251, %v266
      %v272 = vmul.f32 %v251, %v270
      %v273 = vadd.f32 %v247, %v271
      %v274 = vadd.f32 %v248, %v272
      %275 = vset.pattern.permute.xlu0 2
      %276 = vperm.xlu0 %275, %v222
      %v277 = vpop.permute.xlu0 %276
      %v279 = vlaneseq
      %v280 = vshrl.u32 %v279, 7
      %v281 = vsub.s32 2, %v280
      %v282 = vrot.slane %v221, %v281
      %v283 = vlaneseq
      %v284 = vshrl.u32 %v283, 7
      %v285 = vsub.s32 6, %v284
      %v286 = vrot.slane %v221, %v285
      %v289 = vlaneseq
      %v290 = vshrl.u32 %v289, 7
      %v291 = vsub.s32 2, %v290
      %v292 = vrot.slane %v282, %v291
      %v293 = vlaneseq
      %v294 = vshrl.u32 %v293, 7
      %v295 = vsub.s32 2, %v294
      %v296 = vrot.slane %v286, %v295
      %v297 = vmul.f32 %v277, %v292
      %v298 = vmul.f32 %v277, %v296
      %v299 = vadd.f32 %v273, %v297
      %v300 = vadd.f32 %v274, %v298
      %301 = vset.pattern.permute.xlu0 3
      %302 = vperm.xlu0 %301, %v222
      %v303 = vpop.permute.xlu0 %302
      %v305 = vlaneseq
      %v306 = vshrl.u32 %v305, 7
      %v307 = vsub.s32 3, %v306
      %v308 = vrot.slane %v221, %v307
      %v309 = vlaneseq
      %v310 = vshrl.u32 %v309, 7
      %v311 = vsub.s32 7, %v310
      %v312 = vrot.slane %v221, %v311
      %v315 = vlaneseq
      %v316 = vshrl.u32 %v315, 7
      %v317 = vsub.s32 3, %v316
      %v318 = vrot.slane %v308, %v317
      %v319 = vlaneseq
      %v320 = vshrl.u32 %v319, 7
      %v321 = vsub.s32 3, %v320
      %v322 = vrot.slane %v312, %v321
      %v323 = vmul.f32 %v303, %v318
      %v324 = vmul.f32 %v303, %v322
      %v325 = vadd.f32 %v299, %v323
      %v326 = vadd.f32 %v300, %v324
      %v329 = vcombine.low %v325, %v326
      %331 = vst [vmem:[%s215] sm:$0xff] %v329
      %p332 = scmp.eq.s32.totalorder %s20, 0
      // Predicated region
      $region29: #{ghost_conv.3} parent=27 // pred_check
        %p333 = pneg %p332
      $region30: #{ghost_conv.3} parent=27 // pred_check_branch
        %335 = sbr.rel (%p333) target = $region32
      $region31: #{ghost_conv.3} parent=27 // pred_region
        %vm336 = vcmask 11264
        %337 = vst.msk [vmem:[%s220] sm:$0xf] %vm336, 0.0
      $region32: #{ghost_conv.3} parent=27 // pred_fallthru
        _
      %v338 = vld [vmem:[%s220] sm:$0xf]
      %vm339 = vcmask 1043456
      %v340 = vsel %vm339, %v325, 0.0
      %v341 = vsel %vm339, %v326, 0.0
      %v342 = vadd.f32 %v340, %v341
      %343 = vadd.xlane.f32.xlu0 %v342
      %v344 = vpop.xlane.xlu0 %343
      %v345 = vadd.f32 %v338, %v344
      %vm346 = vcmask 3072
      %347 = vst.msk [vmem:[%s220] sm:$0xf] %vm346, %v345
      %v348 = vld [vmem:[%s220] sm:$0xf]
      %v349 = vmul.f32 %v325, %v325
      %v350 = vmul.f32 %v326, %v326
      %v351 = vsel %vm339, %v349, 0.0
      %v352 = vsel %vm339, %v350, 0.0
      %v353 = vadd.f32 %v351, %v352
      %354 = vadd.xlane.f32.xlu0 %v353
      %v355 = vpop.xlane.xlu0 %354
      %v356 = vadd.f32 %v348, %v355
      %vm357 = vcmask 11272
      %358 = vst.msk [vmem:[%s220] sm:$0xf] %vm357, %v356
      %s359 = smul.u32 2, %s20
      %p360 = scmp.lt.s32.totalorder %s19, 1
      %s361 = scalar_select %p360, %s19, 1
      %p362 = scmp.lt.s32.totalorder %s359, 1
      %s363 = scalar_select %p362, %s359, 1
      %s364 = smul.addr %s361, 2
      %s365 = sadd.s32 %s363, %s364
      %s366 = smul.addr %s365, 4
      %s367 = scalar_lea.vmem %s2, %s366
      %p368 = scmp.lt.s32.totalorder %s19, 1
      %s369 = scalar_select %p368, %s19, 1
      %s370 = smul.addr %s369, 4
      %s371 = scalar_lea.vmem %s3, %s370
      // Predicated region
      $region33: #{ghost_conv.3} parent=27 // pred_check
        %p372 = pneg %p96
      $region34: #{ghost_conv.3} parent=27 // pred_check_branch
        %374 = sbr.rel (%p372) target = $region36
      $region35: #{ghost_conv.3} parent=27 // pred_region
        %s375 = smul.u32 2, %s20
      $region36: #{ghost_conv.3} parent=27 // pred_fallthru
        _
      // Predicated region
      $region37: #{ghost_conv.3} parent=27 // pred_check
        %p376 = pneg %p122
      $region38: #{ghost_conv.3} parent=27 // pred_check_branch
        %378 = sbr.rel (%p376) target = $region40
      $region39: #{ghost_conv.3} parent=27 // pred_region
        _
      $region40: #{ghost_conv.3} parent=27 // pred_fallthru
        _
    $region28: #{ghost_conv.3} parent=5 // pred_fallthru
      _
    %p379 = scmp.le.s32.totalorder 2, %s10
    // Predicated region
    $region41: #{ghost_conv.3} parent=5 // pred_check
      %p380 = pneg %p379
    $region42: #{ghost_conv.3} parent=5 // pred_check_branch
      %382 = sbr.rel (%p380) target = $region44
    $region43: #{ghost_conv.3} parent=5 // pred_region
      %s383 = ssub.s32 %s10, 2
      // Predicated region
      $region45: #{ghost_conv.3} parent=43 // pred_check
        %p384 = pneg %p102
      $region46: #{ghost_conv.3} parent=43 // pred_check_branch
        %386 = sbr.rel (%p384) target = $region48
      $region47: #{ghost_conv.3} parent=43 // pred_region
        %s387 = smul.u32 2, %s22
        %p388 = scmp.lt.s32.totalorder %s21, 1
        %s389 = scalar_select %p388, %s21, 1
        %p390 = scmp.lt.s32.totalorder %s387, 1
        %s391 = scalar_select %p390, %s387, 1
        %s392 = smul.addr %s389, 2
        %s393 = sadd.s32 %s391, %s392
        %s394 = smul.addr %s393, 4
        %s395 = scalar_lea.vmem %s2, %s394
      $region48: #{ghost_conv.3} parent=43 // pred_fallthru
        _
      // Predicated region
      $region49: #{ghost_conv.3} parent=43 // pred_check
        %p396 = pneg %p128
      $region50: #{ghost_conv.3} parent=43 // pred_check_branch
        %398 = sbr.rel (%p396) target = $region52
      $region51: #{ghost_conv.3} parent=43 // pred_region
        %p399 = scmp.lt.s32.totalorder %s21, 1
        %s400 = scalar_select %p399, %s21, 1
        %s401 = smul.addr %s400, 4
        %s402 = scalar_lea.vmem %s3, %s401
      $region52: #{ghost_conv.3} parent=43 // pred_fallthru
        _
    $region44: #{ghost_conv.3} parent=5 // pred_fallthru
      _
  $region6: #{ghost_conv.3} parent=0 // loop_footer
    %s14 = sadd.s32 1, %s10
  $region7: #{ghost_conv.3} parent=0 // loop_footer_branch
    %9 = sbr.rel target = $region3
  $region8: #{ghost_conv.3} parent=0 // loop_exit
    _

// kernel: ghost_conv.5
$region0: #{ghost_conv.5}
  #allocation0 [shape = 'u32[]', space=smem, size = 0x4, offset = 0x4, fixed_abs, tag = 'smem constant byte address 0x4 - core index']
  #allocation1 [shape = 'u32[144,128]{1,0:T(1,128)}', space=vmem, size = 0x12000, scoped, tag = 'internal scratch']
  %s0 = inlined_call_operand.vmem [shape: f32[2,4,256], index: 0, kind: input, shape index: {}]
  %s1 = inlined_call_operand.vmem [shape: f32[4,1], index: 1, kind: input, shape index: {}]
  %s2 = inlined_call_operand.vmem [shape: f32[4,1], index: 2, kind: input, shape index: {}]
  %s3 = inlined_call_operand.vmem [shape: f32[2,2,4,256], index: 3, kind: input, shape index: {}, may-alias: {3,4}]
  %s4 = inlined_call_operand.vmem [shape: f32[2,2,4,256], index: 4, kind: output, shape index: {}, may-alias: {3,4}]
  %s5 = sld [smem:[#allocation0]]
  $region45: #{ghost_conv.5} parent=0
    _
  %s7 = ssub.s32 1, %s5
  %s8 = scalar_select 0, %s7, %s5
  loop: start=0, step=1, limit=4
  $region2: #{ghost_conv.5} parent=0 // loop_pre_header
    _
  $region3: #{ghost_conv.5} parent=0 // loop_header
    %s10 = sphi 0, %s14
    %p11 = scmp.ge.s32.totalorder %s10, 4
    %s17 = sphi 0, %s29
    %s18 = sphi 0, %s25
    %s19 = sphi 0, %s17
    %s20 = sphi 0, %s18
    %s21 = sphi 0, %s19
    %s22 = sphi 0, %s20
    %s34 = sphi 0, %s36
    %s37 = sphi 0, %s34
    %s38 = sphi 0, %s37
    %s54 = sphi 0, %s38
    %s58 = sphi 0, %s58
    %s60 = sphi 0, %s58
    %s61 = sphi 0, %s60
    %s75 = sphi 0, %s61
    %s79 = sphi 0, %s79
    %s81 = sphi 0, %s79
    %s82 = sphi 0, %s81
    %s96 = sphi 0, %s82
    %s104 = sphi 0, %s106
    %s107 = sphi 0, %s104
    %s108 = sphi 0, %s107
    %s124 = sphi 0, %s108
  $region4: #{ghost_conv.5} parent=0 // loop_header_branch
    %13 = sbr.rel (%p11) target = $region8
  $region5: #{ghost_conv.5} parent=0 // loop_body
    %s15 = ssub.s32 %s10, 1
    %s16 = ssub.s32 %s10, 2
    %s23 = sadd.s32 1, %s18
    %p24 = scmp.ge.s32.totalorder %s23, 1
    %s25 = scalar_select %p24, 0, %s23
    %s26 = sadd.s32 1, %s17
    %s27 = scalar_select %p24, %s26, %s17
    %p28 = scmp.ge.s32.totalorder %s27, 2
    %s29 = scalar_select %p28, 0, %s27
    %s30 = ssub.s32 %s17, %s29
    %s31 = ssub.s32 %s18, %s25
    %s32 = sor.u32 %s30, %s31
    %p33 = scmp.eq.s32.totalorder %s32, 0
    %s35 = sadd.s32 %s34, 1
    %s36 = scalar_select %p33, %s34, %s35
    %p39 = pneg %p33
    %p40 = scmp.eq.s32.totalorder %s10, 1
    %p41 = por %p39, %p40
    %p42 = scmp.ne.s32.totalorder %s34, %s37
    %p43 = scmp.eq.s32.totalorder %s10, 0
    %p44 = por %p42, %p43
    %p45 = scmp.ne.s32.totalorder %s34, %s37
    %p46 = scmp.eq.s32.totalorder %s15, 1
    %p47 = por %p45, %p46
    %p48 = scmp.ne.s32.totalorder %s37, %s38
    %p49 = scmp.eq.s32.totalorder %s15, 0
    %p50 = por %p48, %p49
    %p51 = scmp.ne.s32.totalorder %s37, %s38
    %p52 = scmp.eq.s32.totalorder %s16, 1
    %p53 = por %p51, %p52
    %p55 = scmp.ne.s32.totalorder %s38, %s54
    %p56 = scmp.eq.s32.totalorder %s16, 0
    %p57 = por %p55, %p56
    %s59 = sadd.s32 %s58, 1
    %p62 = scmp.eq.s32.totalorder %s10, 1
    %p63 = scmp.ne.s32.totalorder %s58, %s60
    %p64 = scmp.eq.s32.totalorder %s10, 0
    %p65 = por %p63, %p64
    %p66 = scmp.ne.s32.totalorder %s58, %s60
    %p67 = scmp.eq.s32.totalorder %s15, 1
    %p68 = por %p66, %p67
    %p69 = scmp.ne.s32.totalorder %s60, %s61
    %p70 = scmp.eq.s32.totalorder %s15, 0
    %p71 = por %p69, %p70
    %p72 = scmp.ne.s32.totalorder %s60, %s61
    %p73 = scmp.eq.s32.totalorder %s16, 1
    %p74 = por %p72, %p73
    %p76 = scmp.ne.s32.totalorder %s61, %s75
    %p77 = scmp.eq.s32.totalorder %s16, 0
    %p78 = por %p76, %p77
    %s80 = sadd.s32 %s79, 1
    %p83 = scmp.eq.s32.totalorder %s10, 1
    %p84 = scmp.ne.s32.totalorder %s79, %s81
    %p85 = scmp.eq.s32.totalorder %s10, 0
    %p86 = por %p84, %p85
    %p87 = scmp.ne.s32.totalorder %s79, %s81
    %p88 = scmp.eq.s32.totalorder %s15, 1
    %p89 = por %p87, %p88
    %p90 = scmp.ne.s32.totalorder %s81, %s82
    %p91 = scmp.eq.s32.totalorder %s15, 0
    %p92 = por %p90, %p91
    %p93 = scmp.ne.s32.totalorder %s81, %s82
    %p94 = scmp.eq.s32.totalorder %s16, 1
    %p95 = por %p93, %p94
    %p97 = scmp.ne.s32.totalorder %s82, %s96
    %p98 = scmp.eq.s32.totalorder %s16, 0
    %p99 = por %p97, %p98
    %s100 = ssub.s32 %s17, %s29
    %s101 = ssub.s32 %s18, %s25
    %s102 = sor.u32 %s100, %s101
    %p103 = scmp.eq.s32.totalorder %s102, 0
    %s105 = sadd.s32 %s104, 1
    %s106 = scalar_select %p103, %s104, %s105
    %p109 = pneg %p103
    %p110 = scmp.eq.s32.totalorder %s10, 1
    %p111 = por %p109, %p110
    %p112 = scmp.ne.s32.totalorder %s104, %s107
    %p113 = scmp.eq.s32.totalorder %s10, 0
    %p114 = por %p112, %p113
    %p115 = scmp.ne.s32.totalorder %s104, %s107
    %p116 = scmp.eq.s32.totalorder %s15, 1
    %p117 = por %p115, %p116
    %p118 = scmp.ne.s32.totalorder %s107, %s108
    %p119 = scmp.eq.s32.totalorder %s15, 0
    %p120 = por %p118, %p119
    %p121 = scmp.ne.s32.totalorder %s107, %s108
    %p122 = scmp.eq.s32.totalorder %s16, 1
    %p123 = por %p121, %p122
    %p125 = scmp.ne.s32.totalorder %s108, %s124
    %p126 = scmp.eq.s32.totalorder %s16, 0
    %p127 = por %p125, %p126
    %p128 = scmp.le.s32.totalorder 1, %s10
    %p129 = scmp.lt.s32.totalorder %s10, 3
    %p130 = pnand %p128, %p129
    %p131 = pneg %p130
    // Predicated region
    $region9: #{ghost_conv.5} parent=5 // pred_check
      _
    $region10: #{ghost_conv.5} parent=5 // pred_check_branch
      %133 = sbr.rel (%p130) target = $region12
    $region11: #{ghost_conv.5} parent=5 // pred_region
      %s134 = ssub.s32 %s10, 1
      // Predicated region
      $region13: #{ghost_conv.5} parent=11 // pred_check
        %p135 = pneg %p71
      $region14: #{ghost_conv.5} parent=11 // pred_check_branch
        %137 = sbr.rel (%p135) target = $region16
      $region15: #{ghost_conv.5} parent=11 // pred_region
        _
      $region16: #{ghost_conv.5} parent=11 // pred_fallthru
        _
      // Predicated region
      $region17: #{ghost_conv.5} parent=11 // pred_check
        %p138 = pneg %p92
      $region18: #{ghost_conv.5} parent=11 // pred_check_branch
        %140 = sbr.rel (%p138) target = $region20
      $region19: #{ghost_conv.5} parent=11 // pred_region
        _
      $region20: #{ghost_conv.5} parent=11 // pred_fallthru
        _
    $region12: #{ghost_conv.5} parent=5 // pred_fallthru
      _
    %p141 = scmp.lt.s32.totalorder %s10, 2
    // Predicated region
    $region21: #{ghost_conv.5} parent=5 // pred_check
      %p142 = pneg %p141
    $region22: #{ghost_conv.5} parent=5 // pred_check_branch
      %144 = sbr.rel (%p142) target = $region24
    $region23: #{ghost_conv.5} parent=5 // pred_region
      // Predicated region
      $region25: #{ghost_conv.5} parent=23 // pred_check
        %p145 = pneg %p44
      $region26: #{ghost_conv.5} parent=23 // pred_check_branch
        %147 = sbr.rel (%p145) target = $region28
      $region27: #{ghost_conv.5} parent=23 // pred_region
        %s148 = smul.u32 2, %s18
        %p149 = scmp.lt.s32.totalorder %s17, 1
        %s150 = scalar_select %p149, %s17, 1
        %p151 = scmp.lt.s32.totalorder %s148, 1
        %s152 = scalar_select %p151, %s148, 1
        %s153 = smul.addr %s150, 2
        %s154 = sadd.s32 %s152, %s153
        %s155 = smul.addr %s154, 4
        %s156 = scalar_lea.vmem %s0, %s155
        %s157 = smul.u32 2, %s18
      $region28: #{ghost_conv.5} parent=23 // pred_fallthru
        _
    $region24: #{ghost_conv.5} parent=5 // pred_fallthru
      _
    %p158 = scmp.le.s32.totalorder 1, %s10
    %p159 = scmp.lt.s32.totalorder %s10, 3
    %p160 = pnand %p158, %p159
    %p161 = pneg %p160
    // Predicated region
    $region29: #{ghost_conv.5} parent=5 // pred_check
      _
    $region30: #{ghost_conv.5} parent=5 // pred_check_branch
      %163 = sbr.rel (%p160) target = $region32
    $region31: #{ghost_conv.5} parent=5 // pred_region
      %s164 = ssub.s32 %s10, 1
      %s165 = smul.u32 2, %s20
      %p166 = scmp.lt.s32.totalorder %s19, 1
      %s167 = scalar_select %p166, %s19, 1
      %p168 = scmp.lt.s32.totalorder %s165, 1
      %s169 = scalar_select %p168, %s165, 1
      %s170 = smul.addr %s167, 2
      %s171 = sadd.s32 %s169, %s170
      %s172 = smul.addr %s171, 4
      %s173 = scalar_lea.vmem %s0, %s172
      %p174 = pneg %p50
      %p175 = pneg %p47
      %p176 = pneg %p71
      %p177 = pneg %p68
      %p178 = pneg %p92
      %p179 = pneg %p89
      %p180 = pneg %p120
      %p181 = pneg %p117
      %s182 = smul.u32 2, %s20
      %p183 = scmp.lt.s32.totalorder %s19, 1
      %s184 = scalar_select %p183, %s19, 1
      %p185 = scmp.lt.s32.totalorder %s182, 1
      %s186 = scalar_select %p185, %s182, 1
      %s187 = sadd.s32 %s186, 2
      %s188 = smul.addr %s184, 4
      %s189 = sadd.s32 %s187, %s188
      %s190 = smul.addr %s189, 4
      %s191 = scalar_lea.vmem %s4, %s190
      %s192 = smul.u32 2, %s20
      %p193 = scmp.lt.s32.totalorder %s19, 1
      %s194 = scalar_select %p193, %s19, 1
      %p195 = scmp.lt.s32.totalorder %s192, 1
      %s196 = scalar_select %p195, %s192, 1
      %s197 = smul.addr %s194, 2
      %s198 = sadd.s32 %s196, %s197
      %s199 = smul.addr %s198, 4
      %s200 = scalar_lea.vmem %s0, %s199
      %s201 = smul.u32 2, %s20
      %s202 = smul.u32 2, %s20
      %p203 = scmp.lt.s32.totalorder %s19, 1
      %s204 = scalar_select %p203, %s19, 1
      %p205 = scmp.lt.s32.totalorder %s202, 1
      %s206 = scalar_select %p205, %s202, 1
      %s207 = sadd.s32 %s206, 2
      %s208 = smul.addr %s204, 4
      %s209 = sadd.s32 %s207, %s208
      %s210 = smul.addr %s209, 4
      %s211 = scalar_lea.vmem %s4, %s210
      %s212 = smul.u32 2, %s20
      %v213 = vld [vmem:[%s200] sm:$0xff]
      %v214 = vld [vmem:[%s1] sm:$0xf]
      %216 = vset.pattern.permute.xlu0 0
      %217 = vperm.xlu0 %216, %v214
      %v218 = vpop.permute.xlu0 %217
      %v220 = vunpack.c.l.s4 839922192
      %v221 = vunpack.c.0.s8 %v220
      %v222 = vlaneseq
      %v223 = vshrl.u32 %v222, 7
      %v224 = vsub.s32 %v221, %v223
      %v225 = vrot.slane %v218, %v224
      %v227 = vmul.f32 %v213, %v225
      %v228 = vld [vmem:[%s2] sm:$0xf]
      %230 = vset.pattern.permute.xlu0 0
      %231 = vperm.xlu0 %230, %v228
      %v232 = vpop.permute.xlu0 %231
      %v234 = vunpack.c.l.s4 839922192
      %v235 = vunpack.c.0.s8 %v234
      %v236 = vlaneseq
      %v237 = vshrl.u32 %v236, 7
      %v238 = vsub.s32 %v235, %v237
      %v239 = vrot.slane %v232, %v238
      %v241 = vadd.f32 %v227, %v239
      %v242 = vsub.f32 0.0, %v241
      %v243 = vmul.f32 %v242, 1.442695
      %v244 = vpow.pop %v243
      %v245 = vadd.f32 %v244, 1.0
      %v246 = vrcp.pop %v245
      %v247 = vmul.f32 %v241, %v246
      %248 = vst [vmem:[%s211] sm:$0xff] %v247
      %s249 = smul.u32 2, %s20
      %p250 = scmp.lt.s32.totalorder %s19, 1
      %s251 = scalar_select %p250, %s19, 1
      %p252 = scmp.lt.s32.totalorder %s249, 1
      %s253 = scalar_select %p252, %s249, 1
      %s254 = sadd.s32 %s253, 2
      %s255 = smul.addr %s251, 4
      %s256 = sadd.s32 %s254, %s255
      %s257 = smul.addr %s256, 4
      %s258 = scalar_lea.vmem %s4, %s257
      // Predicated region
      $region33: #{ghost_conv.5} parent=31 // pred_check
        %p259 = pneg %p117
      $region34: #{ghost_conv.5} parent=31 // pred_check_branch
        %261 = sbr.rel (%p259) target = $region36
      $region35: #{ghost_conv.5} parent=31 // pred_region
        %s262 = smul.u32 2, %s20
      $region36: #{ghost_conv.5} parent=31 // pred_fallthru
        _
    $region32: #{ghost_conv.5} parent=5 // pred_fallthru
      _
    %p263 = scmp.le.s32.totalorder 2, %s10
    // Predicated region
    $region37: #{ghost_conv.5} parent=5 // pred_check
      %p264 = pneg %p263
    $region38: #{ghost_conv.5} parent=5 // pred_check_branch
      %266 = sbr.rel (%p264) target = $region40
    $region39: #{ghost_conv.5} parent=5 // pred_region
      %s267 = ssub.s32 %s10, 2
      // Predicated region
      $region41: #{ghost_conv.5} parent=39 // pred_check
        %p268 = pneg %p123
      $region42: #{ghost_conv.5} parent=39 // pred_check_branch
        %270 = sbr.rel (%p268) target = $region44
      $region43: #{ghost_conv.5} parent=39 // pred_region
        %s271 = smul.u32 2, %s22
        %p272 = scmp.lt.s32.totalorder %s21, 1
        %s273 = scalar_select %p272, %s21, 1
        %p274 = scmp.lt.s32.totalorder %s271, 1
        %s275 = scalar_select %p274, %s271, 1
        %s276 = sadd.s32 %s275, 2
        %s277 = smul.addr %s273, 4
        %s278 = sadd.s32 %s276, %s277
        %s279 = smul.addr %s278, 4
        %s280 = scalar_lea.vmem %s4, %s279
      $region44: #{ghost_conv.5} parent=39 // pred_fallthru
        _
    $region40: #{ghost_conv.5} parent=5 // pred_fallthru
      _
  $region6: #{ghost_conv.5} parent=0 // loop_footer
    %s14 = sadd.s32 1, %s10
  $region7: #{ghost_conv.5} parent=0 // loop_footer_branch
    %9 = sbr.rel target = $region3
  $region8: #{ghost_conv.5} parent=0 // loop_exit
    _

// kernel: ghost_conv.4
$region0: #{ghost_conv.4}
  #allocation0 [shape = 'u32[]', space=smem, size = 0x4, offset = 0x4, fixed_abs, tag = 'smem constant byte address 0x4 - core index']
  #allocation1 [shape = 'u32[144,128]{1,0:T(1,128)}', space=vmem, size = 0x12000, scoped, tag = 'internal scratch']
  #allocation2 [shape = 'f32[4,418]{1,0:T(4,128)}', space=vmem, size = 0x2000, scoped, tag = 'scratch operand']
  %s0 = inlined_call_operand.vmem [shape: f32[2,4,256], index: 0, kind: input, shape index: {}]
  %s1 = inlined_call_operand.vmem [shape: f32[4,25], index: 1, kind: input, shape index: {}]
  %s2 = inlined_call_operand.vmem [shape: f32[4,1], index: 2, kind: input, shape index: {}]
  %s3 = inlined_call_operand.vmem [shape: f32[4,1], index: 3, kind: input, shape index: {}]
  %s4 = inlined_call_operand.vmem [shape: f32[2,2,4,256], index: 4, kind: output, shape index: {0}]
  %s5 = inlined_call_operand.vmem [shape: f32[2,4,256], index: 5, kind: output, shape index: {1}]
  %s6 = inlined_call_operand.vmem [shape: f32[2,4,2], index: 6, kind: output, shape index: {2}]
  %7 = xla_tuple %s4, %s5, %s6
  %s8 = sld [smem:[#allocation0]]
  $region69: #{ghost_conv.4} parent=0
    _
  %s10 = ssub.s32 1, %s8
  %s11 = scalar_select 0, %s10, %s8
  loop: start=0, step=1, limit=4
  $region2: #{ghost_conv.4} parent=0 // loop_pre_header
    _
  $region3: #{ghost_conv.4} parent=0 // loop_header
    %s13 = sphi 0, %s17
    %p14 = scmp.ge.s32.totalorder %s13, 4
    %s20 = sphi 0, %s32
    %s21 = sphi 0, %s28
    %s22 = sphi 0, %s20
    %s23 = sphi 0, %s21
    %s24 = sphi 0, %s22
    %s25 = sphi 0, %s23
    %s37 = sphi 0, %s39
    %s40 = sphi 0, %s37
    %s41 = sphi 0, %s40
    %s57 = sphi 0, %s41
    %s63 = sphi 0, %s65
    %s66 = sphi 0, %s63
    %s67 = sphi 0, %s66
    %s83 = sphi 0, %s67
    %s89 = sphi 0, %s91
    %s92 = sphi 0, %s89
    %s93 = sphi 0, %s92
    %s109 = sphi 0, %s93
    %s115 = sphi 0, %s117
    %s118 = sphi 0, %s115
    %s119 = sphi 0, %s118
    %s135 = sphi 0, %s119
    %s143 = sphi 0, %s145
    %s146 = sphi 0, %s143
    %s147 = sphi 0, %s146
    %s163 = sphi 0, %s147
    %s171 = sphi 0, %s173
    %s174 = sphi 0, %s171
    %s175 = sphi 0, %s174
    %s191 = sphi 0, %s175
    %s197 = sphi 0, %s199
    %s200 = sphi 0, %s197
    %s201 = sphi 0, %s200
    %s217 = sphi 0, %s201
  $region4: #{ghost_conv.4} parent=0 // loop_header_branch
    %16 = sbr.rel (%p14) target = $region8
  $region5: #{ghost_conv.4} parent=0 // loop_body
    %s18 = ssub.s32 %s13, 1
    %s19 = ssub.s32 %s13, 2
    %s26 = sadd.s32 1, %s21
    %p27 = scmp.ge.s32.totalorder %s26, 1
    %s28 = scalar_select %p27, 0, %s26
    %s29 = sadd.s32 1, %s20
    %s30 = scalar_select %p27, %s29, %s20
    %p31 = scmp.ge.s32.totalorder %s30, 2
    %s32 = scalar_select %p31, 0, %s30
    %s33 = ssub.s32 %s20, %s32
    %s34 = ssub.s32 %s21, %s28
    %s35 = sor.u32 %s33, %s34
    %p36 = scmp.eq.s32.totalorder %s35, 0
    %s38 = sadd.s32 %s37, 1
    %s39 = scalar_select %p36, %s37, %s38
    %p42 = pneg %p36
    %p43 = scmp.eq.s32.totalorder %s13, 1
    %p44 = por %p42, %p43
    %p45 = scmp.ne.s32.totalorder %s37, %s40
    %p46 = scmp.eq.s32.totalorder %s13, 0
    %p47 = por %p45, %p46
    %p48 = scmp.ne.s32.totalorder %s37, %s40
    %p49 = scmp.eq.s32.totalorder %s18, 1
    %p50 = por %p48, %p49
    %p51 = scmp.ne.s32.totalorder %s40, %s41
    %p52 = scmp.eq.s32.totalorder %s18, 0
    %p53 = por %p51, %p52
    %p54 = scmp.ne.s32.totalorder %s40, %s41
    %p55 = scmp.eq.s32.totalorder %s19, 1
    %p56 = por %p54, %p55
    %p58 = scmp.ne.s32.totalorder %s41, %s57
    %p59 = scmp.eq.s32.totalorder %s19, 0
    %p60 = por %p58, %p59
    %s61 = ssub.s32 %s21, %s28
    %p62 = scmp.eq.s32.totalorder %s61, 0
    %s64 = sadd.s32 %s63, 1
    %s65 = scalar_select %p62, %s63, %s64
    %p68 = pneg %p62
    %p69 = scmp.eq.s32.totalorder %s13, 1
    %p70 = por %p68, %p69
    %p71 = scmp.ne.s32.totalorder %s63, %s66
    %p72 = scmp.eq.s32.totalorder %s13, 0
    %p73 = por %p71, %p72
    %p74 = scmp.ne.s32.totalorder %s63, %s66
    %p75 = scmp.eq.s32.totalorder %s18, 1
    %p76 = por %p74, %p75
    %p77 = scmp.ne.s32.totalorder %s66, %s67
    %p78 = scmp.eq.s32.totalorder %s18, 0
    %p79 = por %p77, %p78
    %p80 = scmp.ne.s32.totalorder %s66, %s67
    %p81 = scmp.eq.s32.totalorder %s19, 1
    %p82 = por %p80, %p81
    %p84 = scmp.ne.s32.totalorder %s67, %s83
    %p85 = scmp.eq.s32.totalorder %s19, 0
    %p86 = por %p84, %p85
    %s87 = ssub.s32 %s21, %s28
    %p88 = scmp.eq.s32.totalorder %s87, 0
    %s90 = sadd.s32 %s89, 1
    %s91 = scalar_select %p88, %s89, %s90
    %p94 = pneg %p88
    %p95 = scmp.eq.s32.totalorder %s13, 1
    %p96 = por %p94, %p95
    %p97 = scmp.ne.s32.totalorder %s89, %s92
    %p98 = scmp.eq.s32.totalorder %s13, 0
    %p99 = por %p97, %p98
    %p100 = scmp.ne.s32.totalorder %s89, %s92
    %p101 = scmp.eq.s32.totalorder %s18, 1
    %p102 = por %p100, %p101
    %p103 = scmp.ne.s32.totalorder %s92, %s93
    %p104 = scmp.eq.s32.totalorder %s18, 0
    %p105 = por %p103, %p104
    %p106 = scmp.ne.s32.totalorder %s92, %s93
    %p107 = scmp.eq.s32.totalorder %s19, 1
    %p108 = por %p106, %p107
    %p110 = scmp.ne.s32.totalorder %s93, %s109
    %p111 = scmp.eq.s32.totalorder %s19, 0
    %p112 = por %p110, %p111
    %s113 = ssub.s32 %s21, %s28
    %p114 = scmp.eq.s32.totalorder %s113, 0
    %s116 = sadd.s32 %s115, 1
    %s117 = scalar_select %p114, %s115, %s116
    %p120 = pneg %p114
    %p121 = scmp.eq.s32.totalorder %s13, 1
    %p122 = por %p120, %p121
    %p123 = scmp.ne.s32.totalorder %s115, %s118
    %p124 = scmp.eq.s32.totalorder %s13, 0
    %p125 = por %p123, %p124
    %p126 = scmp.ne.s32.totalorder %s115, %s118
    %p127 = scmp.eq.s32.totalorder %s18, 1
    %p128 = por %p126, %p127
    %p129 = scmp.ne.s32.totalorder %s118, %s119
    %p130 = scmp.eq.s32.totalorder %s18, 0
    %p131 = por %p129, %p130
    %p132 = scmp.ne.s32.totalorder %s118, %s119
    %p133 = scmp.eq.s32.totalorder %s19, 1
    %p134 = por %p132, %p133
    %p136 = scmp.ne.s32.totalorder %s119, %s135
    %p137 = scmp.eq.s32.totalorder %s19, 0
    %p138 = por %p136, %p137
    %s139 = ssub.s32 %s20, %s32
    %s140 = ssub.s32 %s21, %s28
    %s141 = sor.u32 %s139, %s140
    %p142 = scmp.eq.s32.totalorder %s141, 0
    %s144 = sadd.s32 %s143, 1
    %s145 = scalar_select %p142, %s143, %s144
    %p148 = pneg %p142
    %p149 = scmp.eq.s32.totalorder %s13, 1
    %p150 = por %p148, %p149
    %p151 = scmp.ne.s32.totalorder %s143, %s146
    %p152 = scmp.eq.s32.totalorder %s13, 0
    %p153 = por %p151, %p152
    %p154 = scmp.ne.s32.totalorder %s143, %s146
    %p155 = scmp.eq.s32.totalorder %s18, 1
    %p156 = por %p154, %p155
    %p157 = scmp.ne.s32.totalorder %s146, %s147
    %p158 = scmp.eq.s32.totalorder %s18, 0
    %p159 = por %p157, %p158
    %p160 = scmp.ne.s32.totalorder %s146, %s147
    %p161 = scmp.eq.s32.totalorder %s19, 1
    %p162 = por %p160, %p161
    %p164 = scmp.ne.s32.totalorder %s147, %s163
    %p165 = scmp.eq.s32.totalorder %s19, 0
    %p166 = por %p164, %p165
    %s167 = ssub.s32 %s20, %s32
    %s168 = ssub.s32 %s21, %s28
    %s169 = sor.u32 %s167, %s168
    %p170 = scmp.eq.s32.totalorder %s169, 0
    %s172 = sadd.s32 %s171, 1
    %s173 = scalar_select %p170, %s171, %s172
    %p176 = pneg %p170
    %p177 = scmp.eq.s32.totalorder %s13, 1
    %p178 = por %p176, %p177
    %p179 = scmp.ne.s32.totalorder %s171, %s174
    %p180 = scmp.eq.s32.totalorder %s13, 0
    %p181 = por %p179, %p180
    %p182 = scmp.ne.s32.totalorder %s171, %s174
    %p183 = scmp.eq.s32.totalorder %s18, 1
    %p184 = por %p182, %p183
    %p185 = scmp.ne.s32.totalorder %s174, %s175
    %p186 = scmp.eq.s32.totalorder %s18, 0
    %p187 = por %p185, %p186
    %p188 = scmp.ne.s32.totalorder %s174, %s175
    %p189 = scmp.eq.s32.totalorder %s19, 1
    %p190 = por %p188, %p189
    %p192 = scmp.ne.s32.totalorder %s175, %s191
    %p193 = scmp.eq.s32.totalorder %s19, 0
    %p194 = por %p192, %p193
    %s195 = ssub.s32 %s20, %s32
    %p196 = scmp.eq.s32.totalorder %s195, 0
    %s198 = sadd.s32 %s197, 1
    %s199 = scalar_select %p196, %s197, %s198
    %p202 = pneg %p196
    %p203 = scmp.eq.s32.totalorder %s13, 1
    %p204 = por %p202, %p203
    %p205 = scmp.ne.s32.totalorder %s197, %s200
    %p206 = scmp.eq.s32.totalorder %s13, 0
    %p207 = por %p205, %p206
    %p208 = scmp.ne.s32.totalorder %s197, %s200
    %p209 = scmp.eq.s32.totalorder %s18, 1
    %p210 = por %p208, %p209
    %p211 = scmp.ne.s32.totalorder %s200, %s201
    %p212 = scmp.eq.s32.totalorder %s18, 0
    %p213 = por %p211, %p212
    %p214 = scmp.ne.s32.totalorder %s200, %s201
    %p215 = scmp.eq.s32.totalorder %s19, 1
    %p216 = por %p214, %p215
    %p218 = scmp.ne.s32.totalorder %s201, %s217
    %p219 = scmp.eq.s32.totalorder %s19, 0
    %p220 = por %p218, %p219
    %p221 = scmp.le.s32.totalorder 1, %s13
    %p222 = scmp.lt.s32.totalorder %s13, 3
    %p223 = pnand %p221, %p222
    %p224 = pneg %p223
    // Predicated region
    $region9: #{ghost_conv.4} parent=5 // pred_check
      _
    $region10: #{ghost_conv.4} parent=5 // pred_check_branch
      %226 = sbr.rel (%p223) target = $region12
    $region11: #{ghost_conv.4} parent=5 // pred_region
      %s227 = ssub.s32 %s13, 1
      // Predicated region
      $region13: #{ghost_conv.4} parent=11 // pred_check
        %p228 = pneg %p79
      $region14: #{ghost_conv.4} parent=11 // pred_check_branch
        %230 = sbr.rel (%p228) target = $region16
      $region15: #{ghost_conv.4} parent=11 // pred_region
        %p231 = scmp.lt.s32.totalorder %s23, 0
        %s232 = scalar_select %p231, %s23, 0
        %s233 = smul.addr %s232, 4
        %s234 = scalar_lea.vmem %s1, %s233
      $region16: #{ghost_conv.4} parent=11 // pred_fallthru
        _
      // Predicated region
      $region17: #{ghost_conv.4} parent=11 // pred_check
        %p235 = pneg %p105
      $region18: #{ghost_conv.4} parent=11 // pred_check_branch
        %237 = sbr.rel (%p235) target = $region20
      $region19: #{ghost_conv.4} parent=11 // pred_region
        %p238 = scmp.lt.s32.totalorder %s23, 0
        %s239 = scalar_select %p238, %s23, 0
        %s240 = smul.addr %s239, 4
        %s241 = scalar_lea.vmem %s2, %s240
      $region20: #{ghost_conv.4} parent=11 // pred_fallthru
        _
      // Predicated region
      $region21: #{ghost_conv.4} parent=11 // pred_check
        %p242 = pneg %p131
      $region22: #{ghost_conv.4} parent=11 // pred_check_branch
        %244 = sbr.rel (%p242) target = $region24
      $region23: #{ghost_conv.4} parent=11 // pred_region
        %p245 = scmp.lt.s32.totalorder %s23, 0
        %s246 = scalar_select %p245, %s23, 0
        %s247 = smul.addr %s246, 4
        %s248 = scalar_lea.vmem %s3, %s247
      $region24: #{ghost_conv.4} parent=11 // pred_fallthru
        _
    $region12: #{ghost_conv.4} parent=5 // pred_fallthru
      _
    %p249 = scmp.lt.s32.totalorder %s13, 2
    // Predicated region
    $region25: #{ghost_conv.4} parent=5 // pred_check
      %p250 = pneg %p249
    $region26: #{ghost_conv.4} parent=5 // pred_check_branch
      %252 = sbr.rel (%p250) target = $region28
    $region27: #{ghost_conv.4} parent=5 // pred_region
      // Predicated region
      $region29: #{ghost_conv.4} parent=27 // pred_check
        %p253 = pneg %p47
      $region30: #{ghost_conv.4} parent=27 // pred_check_branch
        %255 = sbr.rel (%p253) target = $region32
      $region31: #{ghost_conv.4} parent=27 // pred_region
        %p256 = scmp.lt.s32.totalorder %s20, 1
        %s257 = scalar_select %p256, %s20, 1
        %p258 = scmp.lt.s32.totalorder %s21, 0
        %s259 = scalar_select %p258, %s21, 0
        %s260 = smul.addr %s259, 2
        %s261 = smul.addr %s257, 2
        %s262 = sadd.s32 %s260, %s261
        %s263 = smul.addr %s262, 4
        %s264 = scalar_lea.vmem %s0, %s263
      $region32: #{ghost_conv.4} parent=27 // pred_fallthru
        _
    $region28: #{ghost_conv.4} parent=5 // pred_fallthru
      _
    %p265 = scmp.le.s32.totalorder 1, %s13
    %p266 = scmp.lt.s32.totalorder %s13, 3
    %p267 = pnand %p265, %p266
    %p268 = pneg %p267
    // Predicated region
    $region33: #{ghost_conv.4} parent=5 // pred_check
      _
    $region34: #{ghost_conv.4} parent=5 // pred_check_branch
      %270 = sbr.rel (%p267) target = $region36
    $region35: #{ghost_conv.4} parent=5 // pred_region
      %s271 = ssub.s32 %s13, 1
      %p272 = scmp.lt.s32.totalorder %s22, 1
      %s273 = scalar_select %p272, %s22, 1
      %p274 = scmp.lt.s32.totalorder %s23, 0
      %s275 = scalar_select %p274, %s23, 0
      %s276 = smul.addr %s275, 2
      %s277 = smul.addr %s273, 2
      %s278 = sadd.s32 %s276, %s277
      %s279 = smul.addr %s278, 4
      %s280 = scalar_lea.vmem %s0, %s279
      %p281 = pneg %p53
      %p282 = pneg %p50
      %p283 = scmp.lt.s32.totalorder %s23, 0
      %s284 = scalar_select %p283, %s23, 0
      %s285 = smul.addr %s284, 4
      %s286 = scalar_lea.vmem %s1, %s285
      %p287 = pneg %p79
      %p288 = pneg %p76
      %p289 = scmp.lt.s32.totalorder %s23, 0
      %s290 = scalar_select %p289, %s23, 0
      %s291 = smul.addr %s290, 4
      %s292 = scalar_lea.vmem %s2, %s291
      %p293 = pneg %p105
      %p294 = pneg %p102
      %p295 = scmp.lt.s32.totalorder %s23, 0
      %s296 = scalar_select %p295, %s23, 0
      %s297 = smul.addr %s296, 4
      %s298 = scalar_lea.vmem %s3, %s297
      %p299 = pneg %p131
      %p300 = pneg %p128
      %p301 = pneg %p159
      %p302 = pneg %p156
      %p303 = scmp.lt.s32.totalorder %s22, 1
      %s304 = scalar_select %p303, %s22, 1
      %p305 = scmp.lt.s32.totalorder %s23, 0
      %s306 = scalar_select %p305, %s23, 0
      %s307 = smul.addr %s306, 2
      %s308 = smul.addr %s304, 4
      %s309 = sadd.s32 %s307, %s308
      %s310 = smul.addr %s309, 4
      %s311 = scalar_lea.vmem %s4, %s310
      %p312 = pneg %p187
      %p313 = pneg %p184
      %p314 = scmp.lt.s32.totalorder %s22, 1
      %s315 = scalar_select %p314, %s22, 1
      %p316 = scmp.lt.s32.totalorder %s23, 0
      %s317 = scalar_select %p316, %s23, 0
      %s318 = smul.addr %s317, 2
      %s319 = smul.addr %s315, 2
      %s320 = sadd.s32 %s318, %s319
      %s321 = smul.addr %s320, 4
      %s322 = scalar_lea.vmem %s5, %s321
      %p323 = pneg %p213
      %p324 = pneg %p210
      %p325 = scmp.lt.s32.totalorder %s22, 1
      %s326 = scalar_select %p325, %s22, 1
      %s327 = smul.addr %s326, 4
      %s328 = scalar_lea.vmem %s6, %s327
      %p329 = scmp.lt.s32.totalorder %s22, 1
      %s330 = scalar_select %p329, %s22, 1
      %p331 = scmp.lt.s32.totalorder %s23, 0
      %s332 = scalar_select %p331, %s23, 0
      %s333 = smul.addr %s332, 2
      %s334 = smul.addr %s330, 2
      %s335 = sadd.s32 %s333, %s334
      %s336 = smul.addr %s335, 4
      %s337 = scalar_lea.vmem %s0, %s336
      %p338 = scmp.lt.s32.totalorder %s23, 0
      %s339 = scalar_select %p338, %s23, 0
      %s340 = smul.addr %s339, 4
      %s341 = scalar_lea.vmem %s1, %s340
      %p342 = scmp.lt.s32.totalorder %s23, 0
      %s343 = scalar_select %p342, %s23, 0
      %s344 = smul.addr %s343, 4
      %s345 = scalar_lea.vmem %s2, %s344
      %p346 = scmp.lt.s32.totalorder %s23, 0
      %s347 = scalar_select %p346, %s23, 0
      %s348 = smul.addr %s347, 4
      %s349 = scalar_lea.vmem %s3, %s348
      %p350 = scmp.lt.s32.totalorder %s22, 1
      %s351 = scalar_select %p350, %s22, 1
      %p352 = scmp.lt.s32.totalorder %s23, 0
      %s353 = scalar_select %p352, %s23, 0
      %s354 = smul.addr %s353, 2
      %s355 = smul.addr %s351, 4
      %s356 = sadd.s32 %s354, %s355
      %s357 = smul.addr %s356, 4
      %s358 = scalar_lea.vmem %s4, %s357
      %p359 = scmp.lt.s32.totalorder %s22, 1
      %s360 = scalar_select %p359, %s22, 1
      %p361 = scmp.lt.s32.totalorder %s23, 0
      %s362 = scalar_select %p361, %s23, 0
      %s363 = smul.addr %s362, 2
      %s364 = smul.addr %s360, 2
      %s365 = sadd.s32 %s363, %s364
      %s366 = smul.addr %s365, 4
      %s367 = scalar_lea.vmem %s5, %s366
      %p368 = scmp.lt.s32.totalorder %s22, 1
      %s369 = scalar_select %p368, %s22, 1
      %s370 = smul.addr %s369, 4
      %s371 = scalar_lea.vmem %s6, %s370
      %v372 = vld [vmem:[%s337] sm:$0xff]
      %v373 = vld [vmem:[%s345] sm:$0xf]
      %375 = vset.pattern.permute.xlu0 0
      %376 = vperm.xlu0 %375, %v373
      %v377 = vpop.permute.xlu0 %376
      %v379 = vunpack.c.l.s4 839922192
      %v380 = vunpack.c.0.s8 %v379
      %v381 = vlaneseq
      %v382 = vshrl.u32 %v381, 7
      %v383 = vsub.s32 %v380, %v382
      %v384 = vrot.slane %v377, %v383
      %v386 = vmul.f32 %v372, %v384
      %v387 = vld [vmem:[%s349] sm:$0xf]
      %389 = vset.pattern.permute.xlu0 0
      %390 = vperm.xlu0 %389, %v387
      %v391 = vpop.permute.xlu0 %390
      %v393 = vunpack.c.l.s4 839922192
      %v394 = vunpack.c.0.s8 %v393
      %v395 = vlaneseq
      %v396 = vshrl.u32 %v395, 7
      %v397 = vsub.s32 %v394, %v396
      %v398 = vrot.slane %v391, %v397
      %v400 = vadd.f32 %v386, %v398
      %v401 = vsub.f32 0.0, %v400
      %v402 = vmul.f32 %v401, 1.442695
      %v403 = vpow.pop %v402
      %v404 = vadd.f32 %v403, 1.0
      %v405 = vrcp.pop %v404
      %v406 = vmul.f32 %v400, %v405
      %407 = vst [vmem:[%s358] sm:$0xff] %v406
      %408 = vst [vmem:[#allocation2] sm:$0xf] 0.0
      %vm409 = vcmask 273408
      %410 = vst.msk [vmem:[#allocation2 + $0xc] sm:$0xf] %vm409, 0.0
      %411 = vst [vmem:[#allocation2 + $0x4] sm:$0xff] %v406
      %v412 = vld [vmem:[%s341] sm:$0xf]
      %v413 = vlaneseq
      %v414 = vand.u32 %v413, 127
      %v415 = vadd.s32 %v414, 128
      %vm416 = vcmp.lt.s32.totalorder %v414, 0
      %v417 = vsub.s32 0, %v414
      %v418 = vsel %vm416, %v417, %v414
      %v419 = vshrl.u32 %v418, 4
      %v420 = vand.u32 %v418, 15
      %v421 = vsub.s32 0, %v420
      %v422 = vsel %vm416, %v421, %v420
      %vm423 = vcmp.lt.s32.totalorder %v415, 0
      %v424 = vsub.s32 0, %v415
      %v425 = vsel %vm423, %v424, %v415
      %v426 = vshrl.u32 %v425, 4
      %v427 = vand.u32 %v425, 15
      %v428 = vsub.s32 0, %v427
      %v429 = vsel %vm423, %v428, %v427
      %vm430 = vcmp.ne.s32.totalorder %v422, 0
      %vm431 = vcmp.ne.s32.totalorder %v429, 0
      %vm432 = vcmp.lt.s32.totalorder %v422, 0
      %vm433 = vcmp.lt.s32.totalorder %v429, 0
      %vm434 = vmand %vm432, %vm430
      %vm435 = vmand %vm433, %vm431
      %v436 = vadd.s32 %v422, 16
      %v437 = vadd.s32 %v429, 16
      %v438 = vsel %vm434, %v436, %v422
      %v439 = vsel %vm435, %v437, %v429
      %v440 = vld [vmem:[#allocation2] sm:$0xff]
      %v441 = vld [vmem:[#allocation2 + $0x8] sm:$0xf]
      %443 = vset.pattern.permute.xlu0 0
      %444 = vperm.xlu0 %443, %v412
      %v445 = vpop.permute.xlu0 %444
      %v447 = vunpack.c.l.s4 839922192
      %v448 = vunpack.c.0.s8 %v447
      %v449 = vlaneseq
      %v450 = vshrl.u32 %v449, 7
      %v451 = vsub.s32 %v448, %v450
      %v452 = vrot.slane %v445, %v451
      %v454 = vmul.f32 %v440, %v452
      %v455 = vmul.f32 %v441, %v452
      %456 = vset.pattern.permute.xlu0 5
      %457 = vperm.xlu0 %456, %v412
      %v458 = vpop.permute.xlu0 %457
      %v460 = vunpack.c.l.s4 839922192
      %v461 = vunpack.c.0.s8 %v460
      %v462 = vlaneseq
      %v463 = vshrl.u32 %v462, 7
      %v464 = vsub.s32 %v461, %v463
      %v465 = vrot.slane %v458, %v464
      %v467 = vmul.f32 %v440, %v465
      %v468 = vmul.f32 %v441, %v465
      %471 = vrot.lane.b32.xlu0 %v467, 112
      %v472 = vpop.permute.xlu0 %471
      %473 = vrot.lane.b32.xlu0 %v468, 112
      %v474 = vpop.permute.xlu0 %473
      %v475 = vrot.slane %v472, 4
      %v476 = vrot.slane %v474, 4
      %vm477 = vcmask 1043456
      %v478 = vsel %vm477, %v475, %v476
      %vm479 = vcmask 916480
      %v480 = vsel %vm479, %v472, %v478
      %v483 = vadd.f32 %v454, %v480
      %v484 = vadd.f32 %v455, %v474
      %485 = vset.pattern.permute.xlu0 10
      %486 = vperm.xlu0 %485, %v412
      %v487 = vpop.permute.xlu0 %486
      %v489 = vunpack.c.l.s4 839922192
      %v490 = vunpack.c.0.s8 %v489
      %v491 = vlaneseq
      %v492 = vshrl.u32 %v491, 7
      %v493 = vsub.s32 %v490, %v492
      %v494 = vrot.slane %v487, %v493
      %v496 = vmul.f32 %v440, %v494
      %v497 = vmul.f32 %v441, %v494
      %500 = vrot.lane.b32.xlu0 %v496, 96
      %v501 = vpop.permute.xlu0 %500
      %502 = vrot.lane.b32.xlu0 %v497, 96
      %v503 = vpop.permute.xlu0 %502
      %v504 = vrot.slane %v501, 4
      %v505 = vrot.slane %v503, 4
      %v506 = vsel %vm477, %v504, %v505
      %vm507 = vcmask 785408
      %v508 = vsel %vm507, %v501, %v506
      %v511 = vadd.f32 %v483, %v508
      %v512 = vadd.f32 %v484, %v503
      %v513 = vld [vmem:[#allocation2 + $0x4] sm:$0xff]
      %v514 = vld [vmem:[#allocation2 + $0xc] sm:$0xf]
      %515 = vset.pattern.permute.xlu0 15
      %516 = vperm.xlu0 %515, %v412
      %v517 = vpop.permute.xlu0 %516
      %v519 = vunpack.c.l.s4 839922192
      %v520 = vunpack.c.0.s8 %v519
      %v521 = vlaneseq
      %v522 = vshrl.u32 %v521, 7
      %v523 = vsub.s32 %v520, %v522
      %v524 = vrot.slane %v517, %v523
      %v526 = vmul.f32 %v513, %v524
      %v527 = vmul.f32 %v514, %v524
      %530 = vrot.lane.b32.xlu0 %v526, 80
      %v531 = vpop.permute.xlu0 %530
      %532 = vrot.lane.b32.xlu0 %v527, 80
      %v533 = vpop.permute.xlu0 %532
      %v534 = vrot.slane %v531, 4
      %vm535 = vcmask 654336
      %v536 = vsel %vm535, %v534, %v531
      %v537 = vsel %vm535, %v534, %v533
      %v540 = vadd.f32 %v511, %v536
      %v541 = vadd.f32 %v512, %v537
      %542 = vset.pattern.permute.xlu0 20
      %543 = vperm.xlu0 %542, %v412
      %v544 = vpop.permute.xlu0 %543
      %v546 = vunpack.c.l.s4 839922192
      %v547 = vunpack.c.0.s8 %v546
      %v548 = vlaneseq
      %v549 = vshrl.u32 %v548, 7
      %v550 = vsub.s32 %v547, %v549
      %v551 = vrot.slane %v544, %v550
      %v553 = vmul.f32 %v513, %v551
      %v554 = vmul.f32 %v514, %v551
      %557 = vrot.lane.b32.xlu0 %v553, 64
      %v558 = vpop.permute.xlu0 %557
      %559 = vrot.lane.b32.xlu0 %v554, 64
      %v560 = vpop.permute.xlu0 %559
      %v561 = vrot.slane %v558, 4
      %vm562 = vcmask 523264
      %v563 = vsel %vm562, %v561, %v558
      %v564 = vsel %vm562, %v561, %v560
      %v567 = vadd.f32 %v540, %v563
      %v568 = vadd.f32 %v541, %v564
      %vm569 = vcmp.ge.s32.totalorder %v438, 2
      %vm570 = vcmp.ge.s32.totalorder %v439, 2
      %v571 = vsel %vm569, 1, 0
      %v572 = vsel %vm570, 1, 0
      %vm573 = vcmp.eq.s32.totalorder %v571, 1
      %vm574 = vcmp.eq.s32.totalorder %v572, 1
      %v577 = vcombine.high %v567, %v567
      %578 = vrot.lane.b32.xlu0 %v567, 34
      %v579 = vpop.permute.xlu0 %578
      %580 = vrot.lane.b32.xlu0 %v577, 34
      %v581 = vpop.permute.xlu0 %580
      %582 = vrot.lane.b32.xlu0 %v568, 34
      %v583 = vpop.permute.xlu0 %582
      %vm584 = vcmask 277504
      %v585 = vsel %vm584, %v579, %v581
      %v586 = vsel %vm584, %v581, %v583
      %v589 = vsel %vm573, %v585, 0.0
      %v590 = vsel %vm574, %v586, 0.0
      %v591 = vld [vmem:[#allocation2] sm:$0xff]
      %v592 = vld [vmem:[#allocation2 + $0x8] sm:$0xf]
      %593 = vset.pattern.permute.xlu0 1
      %594 = vperm.xlu0 %593, %v412
      %v595 = vpop.permute.xlu0 %594
      %v597 = vunpack.c.l.s4 839922192
      %v598 = vunpack.c.0.s8 %v597
      %v599 = vlaneseq
      %v600 = vshrl.u32 %v599, 7
      %v601 = vsub.s32 %v598, %v600
      %v602 = vrot.slane %v595, %v601
      %v604 = vmul.f32 %v591, %v602
      %v605 = vmul.f32 %v592, %v602
      %606 = vset.pattern.permute.xlu0 6
      %607 = vperm.xlu0 %606, %v412
      %v608 = vpop.permute.xlu0 %607
      %v610 = vunpack.c.l.s4 839922192
      %v611 = vunpack.c.0.s8 %v610
      %v612 = vlaneseq
      %v613 = vshrl.u32 %v612, 7
      %v614 = vsub.s32 %v611, %v613
      %v615 = vrot.slane %v608, %v614
      %v617 = vmul.f32 %v591, %v615
      %v618 = vmul.f32 %v592, %v615
      %621 = vrot.lane.b32.xlu0 %v617, 112
      %v622 = vpop.permute.xlu0 %621
      %623 = vrot.lane.b32.xlu0 %v618, 112
      %v624 = vpop.permute.xlu0 %623
      %v625 = vrot.slane %v622, 4
      %v626 = vrot.slane %v624, 4
      %v627 = vsel %vm477, %v625, %v626
      %v628 = vsel %vm479, %v622, %v627
      %v631 = vadd.f32 %v604, %v628
      %v632 = vadd.f32 %v605, %v624
      %633 = vset.pattern.permute.xlu0 11
      %634 = vperm.xlu0 %633, %v412
      %v635 = vpop.permute.xlu0 %634
      %v637 = vunpack.c.l.s4 839922192
      %v638 = vunpack.c.0.s8 %v637
      %v639 = vlaneseq
      %v640 = vshrl.u32 %v639, 7
      %v641 = vsub.s32 %v638, %v640
      %v642 = vrot.slane %v635, %v641
      %v644 = vmul.f32 %v591, %v642
      %v645 = vmul.f32 %v592, %v642
      %648 = vrot.lane.b32.xlu0 %v644, 96
      %v649 = vpop.permute.xlu0 %648
      %650 = vrot.lane.b32.xlu0 %v645, 96
      %v651 = vpop.permute.xlu0 %650
      %v652 = vrot.slane %v649, 4
      %v653 = vrot.slane %v651, 4
      %v654 = vsel %vm477, %v652, %v653
      %v655 = vsel %vm507, %v649, %v654
      %v658 = vadd.f32 %v631, %v655
      %v659 = vadd.f32 %v632, %v651
      %v660 = vld [vmem:[#allocation2 + $0x4] sm:$0xff]
      %v661 = vld [vmem:[#allocation2 + $0xc] sm:$0xf]
      %662 = vset.pattern.permute.xlu0 16
      %663 = vperm.xlu0 %662, %v412
      %v664 = vpop.permute.xlu0 %663
      %v666 = vunpack.c.l.s4 839922192
      %v667 = vunpack.c.0.s8 %v666
      %v668 = vlaneseq
      %v669 = vshrl.u32 %v668, 7
      %v670 = vsub.s32 %v667, %v669
      %v671 = vrot.slane %v664, %v670
      %v673 = vmul.f32 %v660, %v671
      %v674 = vmul.f32 %v661, %v671
      %677 = vrot.lane.b32.xlu0 %v673, 80
      %v678 = vpop.permute.xlu0 %677
      %679 = vrot.lane.b32.xlu0 %v674, 80
      %v680 = vpop.permute.xlu0 %679
      %v681 = vrot.slane %v678, 4
      %v682 = vsel %vm535, %v681, %v678
      %v683 = vsel %vm535, %v681, %v680
      %v686 = vadd.f32 %v658, %v682
      %v687 = vadd.f32 %v659, %v683
      %688 = vset.pattern.permute.xlu0 21
      %689 = vperm.xlu0 %688, %v412
      %v690 = vpop.permute.xlu0 %689
      %v692 = vunpack.c.l.s4 839922192
      %v693 = vunpack.c.0.s8 %v692
      %v694 = vlaneseq
      %v695 = vshrl.u32 %v694, 7
      %v696 = vsub.s32 %v693, %v695
      %v697 = vrot.slane %v690, %v696
      %v699 = vmul.f32 %v660, %v697
      %v700 = vmul.f32 %v661, %v697
      %703 = vrot.lane.b32.xlu0 %v699, 64
      %v704 = vpop.permute.xlu0 %703
      %705 = vrot.lane.b32.xlu0 %v700, 64
      %v706 = vpop.permute.xlu0 %705
      %v707 = vrot.slane %v704, 4
      %v708 = vsel %vm562, %v707, %v704
      %v709 = vsel %vm562, %v707, %v706
      %v712 = vadd.f32 %v686, %v708
      %v713 = vadd.f32 %v687, %v709
      %vm714 = vcmp.ge.s32.totalorder %v438, 1
      %vm715 = vcmp.ge.s32.totalorder %v439, 1
      %v716 = vsel %vm714, 1, 0
      %v717 = vsel %vm715, 1, 0
      %vm718 = vcmp.eq.s32.totalorder %v716, 1
      %vm719 = vcmp.eq.s32.totalorder %v717, 1
      %v722 = vcombine.high %v712, %v712
      %723 = vrot.lane.b32.xlu0 %v712, 33
      %v724 = vpop.permute.xlu0 %723
      %725 = vrot.lane.b32.xlu0 %v722, 33
      %v726 = vpop.permute.xlu0 %725
      %727 = vrot.lane.b32.xlu0 %v713, 33
      %v728 = vpop.permute.xlu0 %727
      %vm729 = vcmask 269312
      %v730 = vsel %vm729, %v724, %v726
      %v731 = vsel %vm729, %v726, %v728
      %v734 = vsel %vm718, %v730, 0.0
      %v735 = vsel %vm719, %v731, 0.0
      %v736 = vadd.f32 %v589, %v734
      %v737 = vadd.f32 %v590, %v735
      %v738 = vld [vmem:[#allocation2] sm:$0xff]
      %v739 = vld [vmem:[#allocation2 + $0x8] sm:$0xf]
      %740 = vset.pattern.permute.xlu0 2
      %741 = vperm.xlu0 %740, %v412
      %v742 = vpop.permute.xlu0 %741
      %v744 = vunpack.c.l.s4 839922192
      %v745 = vunpack.c.0.s8 %v744
      %v746 = vlaneseq
      %v747 = vshrl.u32 %v746, 7
      %v748 = vsub.s32 %v745, %v747
      %v749 = vrot.slane %v742, %v748
      %v751 = vmul.f32 %v738, %v749
      %v752 = vmul.f32 %v739, %v749
      %753 = vset.pattern.permute.xlu0 7
      %754 = vperm.xlu0 %753, %v412
      %v755 = vpop.permute.xlu0 %754
      %v757 = vunpack.c.l.s4 839922192
      %v758 = vunpack.c.0.s8 %v757
      %v759 = vlaneseq
      %v760 = vshrl.u32 %v759, 7
      %v761 = vsub.s32 %v758, %v760
      %v762 = vrot.slane %v755, %v761
      %v764 = vmul.f32 %v738, %v762
      %v765 = vmul.f32 %v739, %v762
      %768 = vrot.lane.b32.xlu0 %v764, 112
      %v769 = vpop.permute.xlu0 %768
      %770 = vrot.lane.b32.xlu0 %v765, 112
      %v771 = vpop.permute.xlu0 %770
      %v772 = vrot.slane %v769, 4
      %v773 = vrot.slane %v771, 4
      %v774 = vsel %vm477, %v772, %v773
      %v775 = vsel %vm479, %v769, %v774
      %v778 = vadd.f32 %v751, %v775
      %v779 = vadd.f32 %v752, %v771
      %v780 = vld [vmem:[#allocation2 + $0x4] sm:$0xff]
      %781 = vset.pattern.permute.xlu0 12
      %782 = vperm.xlu0 %781, %v412
      %v783 = vpop.permute.xlu0 %782
      %v785 = vunpack.c.l.s4 839922192
      %v786 = vunpack.c.0.s8 %v785
      %v787 = vlaneseq
      %v788 = vshrl.u32 %v787, 7
      %v789 = vsub.s32 %v786, %v788
      %v790 = vrot.slane %v783, %v789
      %v792 = vmul.f32 %v780, %v790
      %794 = vrot.lane.b32.xlu0 %v792, 96
      %v795 = vpop.permute.xlu0 %794
      %v796 = vrot.slane %v795, 4
      %v797 = vsel %vm507, %v796, %v795
      %v800 = vadd.f32 %v778, %v797
      %v801 = vadd.f32 %v779, %v796
      %v802 = vld [vmem:[#allocation2 + $0x4] sm:$0xff]
      %v803 = vld [vmem:[#allocation2 + $0xc] sm:$0xf]
      %804 = vset.pattern.permute.xlu0 17
      %805 = vperm.xlu0 %804, %v412
      %v806 = vpop.permute.xlu0 %805
      %v808 = vunpack.c.l.s4 839922192
      %v809 = vunpack.c.0.s8 %v808
      %v810 = vlaneseq
      %v811 = vshrl.u32 %v810, 7
      %v812 = vsub.s32 %v809, %v811
      %v813 = vrot.slane %v806, %v812
      %v815 = vmul.f32 %v802, %v813
      %v816 = vmul.f32 %v803, %v813
      %819 = vrot.lane.b32.xlu0 %v815, 80
      %v820 = vpop.permute.xlu0 %819
      %821 = vrot.lane.b32.xlu0 %v816, 80
      %v822 = vpop.permute.xlu0 %821
      %v823 = vrot.slane %v820, 4
      %v824 = vsel %vm535, %v823, %v820
      %v825 = vsel %vm535, %v823, %v822
      %v828 = vadd.f32 %v800, %v824
      %v829 = vadd.f32 %v801, %v825
      %830 = vset.pattern.permute.xlu0 22
      %831 = vperm.xlu0 %830, %v412
      %v832 = vpop.permute.xlu0 %831
      %v834 = vunpack.c.l.s4 839922192
      %v835 = vunpack.c.0.s8 %v834
      %v836 = vlaneseq
      %v837 = vshrl.u32 %v836, 7
      %v838 = vsub.s32 %v835, %v837
      %v839 = vrot.slane %v832, %v838
      %v841 = vmul.f32 %v802, %v839
      %v842 = vmul.f32 %v803, %v839
      %845 = vrot.lane.b32.xlu0 %v841, 64
      %v846 = vpop.permute.xlu0 %845
      %847 = vrot.lane.b32.xlu0 %v842, 64
      %v848 = vpop.permute.xlu0 %847
      %v849 = vrot.slane %v846, 4
      %v850 = vsel %vm562, %v849, %v846
      %v851 = vsel %vm562, %v849, %v848
      %v854 = vadd.f32 %v828, %v850
      %v855 = vadd.f32 %v829, %v851
      %v858 = vcombine.high %v854, %v854
      %859 = vrot.lane.b32.xlu0 %v854, 32
      %v860 = vpop.permute.xlu0 %859
      %861 = vrot.lane.b32.xlu0 %v858, 32
      %v862 = vpop.permute.xlu0 %861
      %863 = vrot.lane.b32.xlu0 %v855, 32
      %v864 = vpop.permute.xlu0 %863
      %vm865 = vcmask 261120
      %v866 = vsel %vm865, %v860, %v862
      %v867 = vsel %vm865, %v862, %v864
      %v870 = vadd.f32 %v736, %v866
      %v871 = vadd.f32 %v737, %v867
      %v872 = vld [vmem:[#allocation2] sm:$0xff]
      %v873 = vld [vmem:[#allocation2 + $0x8] sm:$0xf]
      %874 = vset.pattern.permute.xlu0 3
      %875 = vperm.xlu0 %874, %v412
      %v876 = vpop.permute.xlu0 %875
      %v878 = vunpack.c.l.s4 839922192
      %v879 = vunpack.c.0.s8 %v878
      %v880 = vlaneseq
      %v881 = vshrl.u32 %v880, 7
      %v882 = vsub.s32 %v879, %v881
      %v883 = vrot.slane %v876, %v882
      %v885 = vmul.f32 %v872, %v883
      %v886 = vmul.f32 %v873, %v883
      %887 = vset.pattern.permute.xlu0 8
      %888 = vperm.xlu0 %887, %v412
      %v889 = vpop.permute.xlu0 %888
      %v891 = vunpack.c.l.s4 839922192
      %v892 = vunpack.c.0.s8 %v891
      %v893 = vlaneseq
      %v894 = vshrl.u32 %v893, 7
      %v895 = vsub.s32 %v892, %v894
      %v896 = vrot.slane %v889, %v895
      %v898 = vmul.f32 %v872, %v896
      %v899 = vmul.f32 %v873, %v896
      %902 = vrot.lane.b32.xlu0 %v898, 112
      %v903 = vpop.permute.xlu0 %902
      %904 = vrot.lane.b32.xlu0 %v899, 112
      %v905 = vpop.permute.xlu0 %904
      %v906 = vrot.slane %v903, 4
      %v907 = vrot.slane %v905, 4
      %v908 = vsel %vm477, %v906, %v907
      %v909 = vsel %vm479, %v903, %v908
      %v912 = vadd.f32 %v885, %v909
      %v913 = vadd.f32 %v886, %v905
      %v914 = vld [vmem:[#allocation2 + $0x4] sm:$0xff]
      %v915 = vld [vmem:[#allocation2 + $0xc] sm:$0xf]
      %916 = vset.pattern.permute.xlu0 13
      %917 = vperm.xlu0 %916, %v412
      %v918 = vpop.permute.xlu0 %917
      %v920 = vunpack.c.l.s4 839922192
      %v921 = vunpack.c.0.s8 %v920
      %v922 = vlaneseq
      %v923 = vshrl.u32 %v922, 7
      %v924 = vsub.s32 %v921, %v923
      %v925 = vrot.slane %v918, %v924
      %v927 = vmul.f32 %v914, %v925
      %v928 = vmul.f32 %v915, %v925
      %931 = vrot.lane.b32.xlu0 %v927, 96
      %v932 = vpop.permute.xlu0 %931
      %933 = vrot.lane.b32.xlu0 %v928, 96
      %v934 = vpop.permute.xlu0 %933
      %v935 = vrot.slane %v932, 4
      %v936 = vsel %vm507, %v935, %v932
      %v937 = vsel %vm507, %v935, %v934
      %v940 = vadd.f32 %v912, %v936
      %v941 = vadd.f32 %v913, %v937
      %942 = vset.pattern.permute.xlu0 18
      %943 = vperm.xlu0 %942, %v412
      %v944 = vpop.permute.xlu0 %943
      %v946 = vunpack.c.l.s4 839922192
      %v947 = vunpack.c.0.s8 %v946
      %v948 = vlaneseq
      %v949 = vshrl.u32 %v948, 7
      %v950 = vsub.s32 %v947, %v949
      %v951 = vrot.slane %v944, %v950
      %v953 = vmul.f32 %v914, %v951
      %v954 = vmul.f32 %v915, %v951
      %957 = vrot.lane.b32.xlu0 %v953, 80
      %v958 = vpop.permute.xlu0 %957
      %959 = vrot.lane.b32.xlu0 %v954, 80
      %v960 = vpop.permute.xlu0 %959
      %v961 = vrot.slane %v958, 4
      %v962 = vsel %vm535, %v961, %v958
      %v963 = vsel %vm535, %v961, %v960
      %v966 = vadd.f32 %v940, %v962
      %v967 = vadd.f32 %v941, %v963
      %968 = vset.pattern.permute.xlu0 23
      %969 = vperm.xlu0 %968, %v412
      %v970 = vpop.permute.xlu0 %969
      %v972 = vunpack.c.l.s4 839922192
      %v973 = vunpack.c.0.s8 %v972
      %v974 = vlaneseq
      %v975 = vshrl.u32 %v974, 7
      %v976 = vsub.s32 %v973, %v975
      %v977 = vrot.slane %v970, %v976
      %v979 = vmul.f32 %v914, %v977
      %v980 = vmul.f32 %v915, %v977
      %983 = vrot.lane.b32.xlu0 %v979, 64
      %v984 = vpop.permute.xlu0 %983
      %985 = vrot.lane.b32.xlu0 %v980, 64
      %v986 = vpop.permute.xlu0 %985
      %v987 = vrot.slane %v984, 4
      %v988 = vsel %vm562, %v987, %v984
      %v989 = vsel %vm562, %v987, %v986
      %v992 = vadd.f32 %v966, %v988
      %v993 = vadd.f32 %v967, %v989
      %vm994 = vcmp.lt.s32.totalorder %v438, 15
      %vm995 = vcmp.lt.s32.totalorder %v439, 15
      %v996 = vsel %vm994, 1, 0
      %v997 = vsel %vm995, 1, 0
      %vm998 = vcmp.eq.s32.totalorder %v996, 1
      %vm999 = vcmp.eq.s32.totalorder %v997, 1
      %v1002 = vcombine.high %v992, %v992
      %1003 = vrot.lane.b32.xlu0 %v992, 31
      %v1004 = vpop.permute.xlu0 %1003
      %1005 = vrot.lane.b32.xlu0 %v1002, 31
      %v1006 = vpop.permute.xlu0 %1005
      %1007 = vrot.lane.b32.xlu0 %v993, 31
      %v1008 = vpop.permute.xlu0 %1007
      %vm1009 = vcmask 252928
      %v1010 = vsel %vm1009, %v1004, %v1006
      %v1011 = vsel %vm1009, %v1006, %v1008
      %v1014 = vsel %vm998, %v1010, 0.0
      %v1015 = vsel %vm999, %v1011, 0.0
      %v1016 = vadd.f32 %v870, %v1014
      %v1017 = vadd.f32 %v871, %v1015
      %v1018 = vld [vmem:[#allocation2] sm:$0xff]
      %v1019 = vld [vmem:[#allocation2 + $0x8] sm:$0xf]
      %1020 = vset.pattern.permute.xlu0 4
      %1021 = vperm.xlu0 %1020, %v412
      %v1022 = vpop.permute.xlu0 %1021
      %v1024 = vunpack.c.l.s4 839922192
      %v1025 = vunpack.c.0.s8 %v1024
      %v1026 = vlaneseq
      %v1027 = vshrl.u32 %v1026, 7
      %v1028 = vsub.s32 %v1025, %v1027
      %v1029 = vrot.slane %v1022, %v1028
      %v1031 = vmul.f32 %v1018, %v1029
      %v1032 = vmul.f32 %v1019, %v1029
      %1033 = vset.pattern.permute.xlu0 9
      %1034 = vperm.xlu0 %1033, %v412
      %v1035 = vpop.permute.xlu0 %1034
      %v1037 = vunpack.c.l.s4 839922192
      %v1038 = vunpack.c.0.s8 %v1037
      %v1039 = vlaneseq
      %v1040 = vshrl.u32 %v1039, 7
      %v1041 = vsub.s32 %v1038, %v1040
      %v1042 = vrot.slane %v1035, %v1041
      %v1044 = vmul.f32 %v1018, %v1042
      %v1045 = vmul.f32 %v1019, %v1042
      %1048 = vrot.lane.b32.xlu0 %v1044, 112
      %v1049 = vpop.permute.xlu0 %1048
      %1050 = vrot.lane.b32.xlu0 %v1045, 112
      %v1051 = vpop.permute.xlu0 %1050
      %v1052 = vrot.slane %v1049, 4
      %v1053 = vrot.slane %v1051, 4
      %v1054 = vsel %vm477, %v1052, %v1053
      %v1055 = vsel %vm479, %v1049, %v1054
      %v1058 = vadd.f32 %v1031, %v1055
      %v1059 = vadd.f32 %v1032, %v1051
      %v1060 = vld [vmem:[#allocation2 + $0x4] sm:$0xff]
      %v1061 = vld [vmem:[#allocation2 + $0xc] sm:$0xf]
      %1062 = vset.pattern.permute.xlu0 14
      %1063 = vperm.xlu0 %1062, %v412
      %v1064 = vpop.permute.xlu0 %1063
      %v1066 = vunpack.c.l.s4 839922192
      %v1067 = vunpack.c.0.s8 %v1066
      %v1068 = vlaneseq
      %v1069 = vshrl.u32 %v1068, 7
      %v1070 = vsub.s32 %v1067, %v1069
      %v1071 = vrot.slane %v1064, %v1070
      %v1073 = vmul.f32 %v1060, %v1071
      %v1074 = vmul.f32 %v1061, %v1071
      %1077 = vrot.lane.b32.xlu0 %v1073, 96
      %v1078 = vpop.permute.xlu0 %1077
      %1079 = vrot.lane.b32.xlu0 %v1074, 96
      %v1080 = vpop.permute.xlu0 %1079
      %v1081 = vrot.slane %v1078, 4
      %v1082 = vsel %vm507, %v1081, %v1078
      %v1083 = vsel %vm507, %v1081, %v1080
      %v1086 = vadd.f32 %v1058, %v1082
      %v1087 = vadd.f32 %v1059, %v1083
      %1088 = vset.pattern.permute.xlu0 19
      %1089 = vperm.xlu0 %1088, %v412
      %v1090 = vpop.permute.xlu0 %1089
      %v1092 = vunpack.c.l.s4 839922192
      %v1093 = vunpack.c.0.s8 %v1092
      %v1094 = vlaneseq
      %v1095 = vshrl.u32 %v1094, 7
      %v1096 = vsub.s32 %v1093, %v1095
      %v1097 = vrot.slane %v1090, %v1096
      %v1099 = vmul.f32 %v1060, %v1097
      %v1100 = vmul.f32 %v1061, %v1097
      %1103 = vrot.lane.b32.xlu0 %v1099, 80
      %v1104 = vpop.permute.xlu0 %1103
      %1105 = vrot.lane.b32.xlu0 %v1100, 80
      %v1106 = vpop.permute.xlu0 %1105
      %v1107 = vrot.slane %v1104, 4
      %v1108 = vsel %vm535, %v1107, %v1104
      %v1109 = vsel %vm535, %v1107, %v1106
      %v1112 = vadd.f32 %v1086, %v1108
      %v1113 = vadd.f32 %v1087, %v1109
      %1114 = vset.pattern.permute.xlu0 24
      %1115 = vperm.xlu0 %1114, %v412
      %v1116 = vpop.permute.xlu0 %1115
      %v1118 = vunpack.c.l.s4 839922192
      %v1119 = vunpack.c.0.s8 %v1118
      %v1120 = vlaneseq
      %v1121 = vshrl.u32 %v1120, 7
      %v1122 = vsub.s32 %v1119, %v1121
      %v1123 = vrot.slane %v1116, %v1122
      %v1125 = vmul.f32 %v1060, %v1123
      %v1126 = vmul.f32 %v1061, %v1123
      %1129 = vrot.lane.b32.xlu0 %v1125, 64
      %v1130 = vpop.permute.xlu0 %1129
      %1131 = vrot.lane.b32.xlu0 %v1126, 64
      %v1132 = vpop.permute.xlu0 %1131
      %v1133 = vrot.slane %v1130, 4
      %v1134 = vsel %vm562, %v1133, %v1130
      %v1135 = vsel %vm562, %v1133, %v1132
      %v1138 = vadd.f32 %v1112, %v1134
      %v1139 = vadd.f32 %v1113, %v1135
      %vm1140 = vcmp.lt.s32.totalorder %v438, 14
      %vm1141 = vcmp.lt.s32.totalorder %v439, 14
      %v1142 = vsel %vm1140, 1, 0
      %v1143 = vsel %vm1141, 1, 0
      %vm1144 = vcmp.eq.s32.totalorder %v1142, 1
      %vm1145 = vcmp.eq.s32.totalorder %v1143, 1
      %v1148 = vcombine.high %v1138, %v1138
      %1149 = vrot.lane.b32.xlu0 %v1138, 30
      %v1150 = vpop.permute.xlu0 %1149
      %1151 = vrot.lane.b32.xlu0 %v1148, 30
      %v1152 = vpop.permute.xlu0 %1151
      %1153 = vrot.lane.b32.xlu0 %v1139, 30
      %v1154 = vpop.permute.xlu0 %1153
      %vm1155 = vcmask 244736
      %v1156 = vsel %vm1155, %v1150, %v1152
      %v1157 = vsel %vm1155, %v1152, %v1154
      %v1160 = vsel %vm1144, %v1156, 0.0
      %v1161 = vsel %vm1145, %v1157, 0.0
      %v1162 = vadd.f32 %v1016, %v1160
      %v1163 = vadd.f32 %v1017, %v1161
      %v1166 = vcombine.low %v1162, %v1163
      %1168 = vst [vmem:[%s367] sm:$0xff] %v1166
      %p1169 = scmp.eq.s32.totalorder %s23, 0
      // Predicated region
      $region37: #{ghost_conv.4} parent=35 // pred_check
        %p1170 = pneg %p1169
      $region38: #{ghost_conv.4} parent=35 // pred_check_branch
        %1172 = sbr.rel (%p1170) target = $region40
      $region39: #{ghost_conv.4} parent=35 // pred_region
        %vm1173 = vcmask 11264
        %1174 = vst.msk [vmem:[%s371] sm:$0xf] %vm1173, 0.0
      $region40: #{ghost_conv.4} parent=35 // pred_fallthru
        _
      %v1175 = vsel %vm477, %v1162, 0.0
      %v1176 = vsel %vm477, %v1163, 0.0
      %v1177 = vadd.f32 %v1175, %v1176
      %1178 = vadd.xlane.f32.xlu0 %v1177
      %v1179 = vpop.xlane.xlu0 %1178
      %v1180 = vmul.f32 %v1162, %v1162
      %v1181 = vmul.f32 %v1163, %v1163
      %v1182 = vsel %vm477, %v1180, 0.0
      %v1183 = vsel %vm477, %v1181, 0.0
      %v1184 = vadd.f32 %v1182, %v1183
      %1185 = vadd.xlane.f32.xlu0 %v1184
      %v1186 = vpop.xlane.xlu0 %1185
      %vm1187 = vcmask 3072
      %1188 = vst.msk [vmem:[%s371] sm:$0xf] %vm1187, %v1179
      %vm1189 = vcmask 11272
      %1190 = vst.msk [vmem:[%s371] sm:$0xf] %vm1189, %v1186
      %p1191 = scmp.lt.s32.totalorder %s22, 1
      %s1192 = scalar_select %p1191, %s22, 1
      %p1193 = scmp.lt.s32.totalorder %s23, 0
      %s1194 = scalar_select %p1193, %s23, 0
      %s1195 = smul.addr %s1194, 2
      %s1196 = smul.addr %s1192, 4
      %s1197 = sadd.s32 %s1195, %s1196
      %s1198 = smul.addr %s1197, 4
      %s1199 = scalar_lea.vmem %s4, %s1198
      %p1200 = scmp.lt.s32.totalorder %s22, 1
      %s1201 = scalar_select %p1200, %s22, 1
      %p1202 = scmp.lt.s32.totalorder %s23, 0
      %s1203 = scalar_select %p1202, %s23, 0
      %s1204 = smul.addr %s1203, 2
      %s1205 = smul.addr %s1201, 2
      %s1206 = sadd.s32 %s1204, %s1205
      %s1207 = smul.addr %s1206, 4
      %s1208 = scalar_lea.vmem %s5, %s1207
      %p1209 = scmp.lt.s32.totalorder %s22, 1
      %s1210 = scalar_select %p1209, %s22, 1
      %s1211 = smul.addr %s1210, 4
      %s1212 = scalar_lea.vmem %s6, %s1211
      // Predicated region
      $region41: #{ghost_conv.4} parent=35 // pred_check
        %p1213 = pneg %p156
      $region42: #{ghost_conv.4} parent=35 // pred_check_branch
        %1215 = sbr.rel (%p1213) target = $region44
      $region43: #{ghost_conv.4} parent=35 // pred_region
        _
      $region44: #{ghost_conv.4} parent=35 // pred_fallthru
        _
      // Predicated region
      $region45: #{ghost_conv.4} parent=35 // pred_check
        %p1216 = pneg %p184
      $region46: #{ghost_conv.4} parent=35 // pred_check_branch
        %1218 = sbr.rel (%p1216) target = $region48
      $region47: #{ghost_conv.4} parent=35 // pred_region
        _
      $region48: #{ghost_conv.4} parent=35 // pred_fallthru
        _
      // Predicated region
      $region49: #{ghost_conv.4} parent=35 // pred_check
        %p1219 = pneg %p210
      $region50: #{ghost_conv.4} parent=35 // pred_check_branch
        %1221 = sbr.rel (%p1219) target = $region52
      $region51: #{ghost_conv.4} parent=35 // pred_region
        _
      $region52: #{ghost_conv.4} parent=35 // pred_fallthru
        _
    $region36: #{ghost_conv.4} parent=5 // pred_fallthru
      _
    %p1222 = scmp.le.s32.totalorder 2, %s13
    // Predicated region
    $region53: #{ghost_conv.4} parent=5 // pred_check
      %p1223 = pneg %p1222
    $region54: #{ghost_conv.4} parent=5 // pred_check_branch
      %1225 = sbr.rel (%p1223) target = $region56
    $region55: #{ghost_conv.4} parent=5 // pred_region
      %s1226 = ssub.s32 %s13, 2
      // Predicated region
      $region57: #{ghost_conv.4} parent=55 // pred_check
        %p1227 = pneg %p162
      $region58: #{ghost_conv.4} parent=55 // pred_check_branch
        %1229 = sbr.rel (%p1227) target = $region60
      $region59: #{ghost_conv.4} parent=55 // pred_region
        %p1230 = scmp.lt.s32.totalorder %s24, 1
        %s1231 = scalar_select %p1230, %s24, 1
        %p1232 = scmp.lt.s32.totalorder %s25, 0
        %s1233 = scalar_select %p1232, %s25, 0
        %s1234 = smul.addr %s1233, 2
        %s1235 = smul.addr %s1231, 4
        %s1236 = sadd.s32 %s1234, %s1235
        %s1237 = smul.addr %s1236, 4
        %s1238 = scalar_lea.vmem %s4, %s1237
      $region60: #{ghost_conv.4} parent=55 // pred_fallthru
        _
      // Predicated region
      $region61: #{ghost_conv.4} parent=55 // pred_check
        %p1239 = pneg %p190
      $region62: #{ghost_conv.4} parent=55 // pred_check_branch
        %1241 = sbr.rel (%p1239) target = $region64
      $region63: #{ghost_conv.4} parent=55 // pred_region
        %p1242 = scmp.lt.s32.totalorder %s24, 1
        %s1243 = scalar_select %p1242, %s24, 1
        %p1244 = scmp.lt.s32.totalorder %s25, 0
        %s1245 = scalar_select %p1244, %s25, 0
        %s1246 = smul.addr %s1245, 2
        %s1247 = smul.addr %s1243, 2
        %s1248 = sadd.s32 %s1246, %s1247
        %s1249 = smul.addr %s1248, 4
        %s1250 = scalar_lea.vmem %s5, %s1249
      $region64: #{ghost_conv.4} parent=55 // pred_fallthru
        _
      // Predicated region
      $region65: #{ghost_conv.4} parent=55 // pred_check
        %p1251 = pneg %p216
      $region66: #{ghost_conv.4} parent=55 // pred_check_branch
        %1253 = sbr.rel (%p1251) target = $region68
      $region67: #{ghost_conv.4} parent=55 // pred_region
        %p1254 = scmp.lt.s32.totalorder %s24, 1
        %s1255 = scalar_select %p1254, %s24, 1
        %s1256 = smul.addr %s1255, 4
        %s1257 = scalar_lea.vmem %s6, %s1256
      $region68: #{ghost_conv.4} parent=55 // pred_fallthru
        _
    $region56: #{ghost_conv.4} parent=5 // pred_fallthru
      _
  $region6: #{ghost_conv.4} parent=0 // loop_footer
    %s17 = sadd.s32 1, %s13
  $region7: #{ghost_conv.4} parent=0 // loop_footer_branch
    %12 = sbr.rel target = $region3
  $region8: #{ghost_conv.4} parent=0 // loop_exit
    _

</llo_original>
